<compile_context>
chip_gen: v7x
topology: tpu7x:2x2x1
jax: 0.10.0
libtpu: 0.0.40
codegen_flags: <defaults>
</compile_context>

<pallas_src>
import functools

import jax
import jax.numpy as jnp
from jax.experimental import pallas as pl
from jax.experimental.pallas import tpu as pltpu


_SMALL_BYTES = 256 * 1024        # below this a fused XLA op beats the Pallas launch
_MAX_FEAT_TILE = 2048            # use one full-feature tile up to this many lanes
_TILE_BUDGET_BYTES = 4 << 20     # target bytes per x tile (per grid step)


def _round_up(x, m):
    return ((x + m - 1) // m) * m


def _round_down(x, m):
    return (x // m) * m


def _device_kind():
    try:
        return jax.devices()[0].device_kind.lower()
    except Exception:  # defensive: never let the heuristic break tracing
        return ""


def _running_norm_kernel(x_ref, mean_ref, inv_std_ref, o_ref, *, clip):
    x = x_ref[...].astype(jnp.float32)            # (tb, tf), compute in f32
    y = (x - mean_ref[...]) * inv_std_ref[...]    # mean/inv_std are (1, tf) f32
    o_ref[...] = jnp.clip(y, -clip, clip).astype(o_ref.dtype)


def _reference(x, running_mean, running_var, epsilon, clip):
    y = (x.astype(jnp.float32) - running_mean) / jnp.sqrt(running_var + epsilon)
    return jnp.clip(y, -clip, clip)


def running_norm_forward(x, running_mean, running_var, epsilon=1e-05, clip=10.0,
                         block_batch=None, block_feat=None,
                         min_pallas_bytes=_SMALL_BYTES, donate_x=False):
    """Pallas implementation of RunningNorm.forward (inference-mode normalization).

    x:            (B, F) float32 or bfloat16 (dtype is preserved on the output)
    running_mean: (1, F) float32
    running_var:  (1, F) float32
    """
    B, F = x.shape
    running_mean = running_mean.reshape(1, F).astype(jnp.float32)
    running_var = running_var.reshape(1, F).astype(jnp.float32)
    # Precompute once (1xF op): removes the per-grid-step rsqrt and guarantees
    # boundary-block garbage lanes never feed rsqrt.
    inv_std = jax.lax.rsqrt(running_var + epsilon)

    itemsize = jnp.dtype(x.dtype).itemsize

    # --- small-shape fast path: launch + per-step overhead dominates ---
    if B * F * itemsize < min_pallas_bytes:
        y = (x.astype(jnp.float32) - running_mean) * inv_std
        return jnp.clip(y, -clip, clip).astype(x.dtype)

    # --- feature tiling: prefer one full-feature tile so mean/inv_std stay resident ---
    full_lanes = _round_up(F, 128)
    if block_feat is None:
        block_feat = F if full_lanes <= _MAX_FEAT_TILE else _MAX_FEAT_TILE
    block_feat = min(block_feat, F)
    if block_feat != F:
        block_feat = max(128, _round_down(block_feat, 128))   # multiple of 128 lanes
        if block_feat >= F:
            block_feat = F
    feat_tiles = pl.cdiv(F, block_feat)
    feat_lanes = _round_up(block_feat, 128)                   # VMEM lanes per tile

    # --- batch tiling: ~4 MiB x tiles; even tile count on v7x for its two TCs ---
    is_v7 = "v7" in _device_kind()
    if block_batch is None:
        max_rows = max(8, _round_down(_TILE_BUDGET_BYTES // (feat_lanes * itemsize), 8))
        if is_v7:
            n_tiles = max(2, 2 * pl.cdiv(B, 2 * max_rows))    # even number of tiles
            block_batch = min(_round_up(pl.cdiv(B, n_tiles), 8), max_rows)
        else:
            block_batch = max_rows
    block_batch = min(block_batch, B)
    if block_batch != B:
        block_batch = _round_up(block_batch, 8)               # sublane multiple
        if block_batch >= B:
            block_batch = B
    batch_tiles = pl.cdiv(B, block_batch)

    # Double-buffered x + out tiles (+ tiny mean/inv_std).  Raise the scoped-VMEM
    # limit explicitly so the ~16-20 MiB working set also compiles on v5e's 16 MiB
    # default; never exceeds 48 MiB (safe on every generation).
    vmem_need = 4 * block_batch * feat_lanes * itemsize + 8 * feat_lanes * 4
    vmem_limit = int(min(48 << 20, max(vmem_need + (4 << 20), 16 << 20)))

    if feat_tiles == 1:
        grid = (batch_tiles,)
        x_spec = pl.BlockSpec((block_batch, F), lambda i: (i, 0))
        mv_spec = pl.BlockSpec((1, F), lambda i: (0, 0))
        out_spec = pl.BlockSpec((block_batch, F), lambda i: (i, 0))
        semantics = ("parallel",)
    else:
        # Feature axis OUTER so mean/inv_std keep the same block index across the
        # inner batch steps (Pallas skips their re-DMA).
        grid = (feat_tiles, batch_tiles)
        x_spec = pl.BlockSpec((block_batch, block_feat), lambda j, i: (i, j))
        mv_spec = pl.BlockSpec((1, block_feat), lambda j, i: (0, j))
        out_spec = pl.BlockSpec((block_batch, block_feat), lambda j, i: (i, j))
        semantics = ("parallel", "parallel")

    kernel = functools.partial(_running_norm_kernel, clip=clip)

    return pl.pallas_call(
        kernel,
        out_shape=jax.ShapeDtypeStruct((B, F), x.dtype),
        grid_spec=pltpu.PrefetchScalarGridSpec(
            num_scalar_prefetch=0,
            grid=grid,
            in_specs=[x_spec, mv_spec, mv_spec],
            out_specs=out_spec,
        ),
        compiler_params=pltpu.CompilerParams(
            dimension_semantics=semantics,
            vmem_limit_bytes=vmem_limit),
        cost_estimate=pl.CostEstimate(
            flops=4 * B * F,
            transcendentals=0,
            bytes_accessed=2 * B * F * itemsize + 2 * F * 4),
        input_output_aliases=({0: 0} if donate_x else {}),
    )(x, running_mean, inv_std)


if __name__ == "__main__":
    key = jax.random.PRNGKey(0)

    def make_case(k, B, F, dtype):
        kx, km, kv = jax.random.split(k, 3)
        x = (jax.random.normal(kx, (B, F), dtype=jnp.float32) * 5.0).astype(dtype)
        mean = 0.1 * jax.random.normal(km, (1, F), dtype=jnp.float32)
        var = jnp.abs(1.0 + 0.1 * jax.random.normal(kv, (1, F), dtype=jnp.float32))
        return x, mean, var

    cases = [
        # (B, F, dtype, kwargs, atol, rtol)
        (8, 32, jnp.float32, {}, 1e-5, 1e-5),                    # fused-XLA fast path
        (1040, 200, jnp.float32, {}, 1e-5, 1e-5),                # Pallas: full-feature tile, masked tail lanes, no pad/slice
        (300, 200, jnp.float32,
         dict(block_batch=128, min_pallas_bytes=0), 1e-5, 1e-5),  # ragged boundary batch block (clipped DMA)
        (264, 384, jnp.bfloat16,
         dict(block_feat=128, min_pallas_bytes=0), 1e-1, 1e-2),   # bf16 I/O + feature-tiled 2-D grid
    ]

    keys = jax.random.split(key, len(cases))
    for k, (B, F, dtype, kwargs, atol, rtol) in zip(keys, cases):
        x, mean, var = make_case(k, B, F, dtype)
        out = jax.block_until_ready(running_norm_forward(x, mean, var, **kwargs))
        assert out.shape == (B, F) and out.dtype == dtype
        ref = _reference(x, mean, var, 1e-05, 10.0)
        assert jnp.allclose(out.astype(jnp.float32), ref, atol=atol, rtol=rtol), \
            f"mismatch at {(B, F, dtype)}"

    print("KERNEL_OK")
</pallas_src>

<mosaic_0001>
module attributes {stable_mosaic.version = 11 : i64} {
  func.func @_running_norm_kernel(%arg0: i32, %arg1: memref<1040x200xf32, #tpu.memory_space<vmem>>, %arg2: memref<1x200xf32, #tpu.memory_space<vmem>>, %arg3: memref<1x200xf32, #tpu.memory_space<vmem>>, %arg4: memref<1040x200xf32, #tpu.memory_space<vmem>>) attributes {dimension_semantics = [#tpu.dimension_semantics<parallel>], iteration_bounds = array<i64: 1>, scalar_prefetch = 0 : i64, scratch_operands = 0 : i64, tpu.core_type = #tpu.core_type<tc>, window_params = [{transform_indices = @transform_0, window_bounds = array<i64: 1040, 200>}, {pipeline_mode = #tpu.pipeline_mode<synchronous>, transform_indices = @transform_1, window_bounds = array<i64: 1, 200>}, {pipeline_mode = #tpu.pipeline_mode<synchronous>, transform_indices = @transform_2, window_bounds = array<i64: 1, 200>}, {transform_indices = @transform_3, window_bounds = array<i64: 1040, 200>}]} {
    %c0 = arith.constant 0 : index
    %c0_0 = arith.constant 0 : index
    %0 = vector.load %arg1[%c0, %c0_0] : memref<1040x200xf32, #tpu.memory_space<vmem>>, vector<1040x200xf32>
    %c0_1 = arith.constant 0 : index
    %c0_2 = arith.constant 0 : index
    %1 = vector.load %arg2[%c0_1, %c0_2] : memref<1x200xf32, #tpu.memory_space<vmem>>, vector<1x200xf32>
    %2 = vector.broadcast %1 : vector<1x200xf32> to vector<1040x200xf32>
    %3 = arith.subf %0, %2 : vector<1040x200xf32>
    %c0_3 = arith.constant 0 : index
    %c0_4 = arith.constant 0 : index
    %4 = vector.load %arg3[%c0_3, %c0_4] : memref<1x200xf32, #tpu.memory_space<vmem>>, vector<1x200xf32>
    %5 = vector.broadcast %4 : vector<1x200xf32> to vector<1040x200xf32>
    %6 = arith.mulf %3, %5 : vector<1040x200xf32>
    %cst = arith.constant -1.000000e+01 : f32
    %cst_5 = arith.constant 1.000000e+01 : f32
    %7 = vector.broadcast %cst : f32 to vector<1040x200xf32>
    %8 = arith.maximumf %7, %6 : vector<1040x200xf32>
    %9 = vector.broadcast %cst_5 : f32 to vector<1040x200xf32>
    %10 = arith.minimumf %9, %8 : vector<1040x200xf32>
    %c0_6 = arith.constant 0 : index
    %c0_7 = arith.constant 0 : index
    %11 = vector.load %arg4[%c0_6, %c0_7] : memref<1040x200xf32, #tpu.memory_space<vmem>>, vector<1040x200xf32>
    tpu.vector_store %arg4[%c0_6, %c0_7], %10 {strides = array<i32>} : memref<1040x200xf32, #tpu.memory_space<vmem>>, vector<1040x200xf32>,
    return
  }
  func.func @transform_0(%arg0: i32) -> (i32, i32) {
    %c0_i32 = arith.constant 0 : i32
    %c0_i32_0 = arith.constant 0 : i32
    return %arg0, %c0_i32 : i32, i32
  }
  func.func @transform_1(%arg0: i32) -> (i32, i32) {
    %c0_i32 = arith.constant 0 : i32
    %c0_i32_0 = arith.constant 0 : i32
    %c0_i32_1 = arith.constant 0 : i32
    return %c0_i32, %c0_i32_0 : i32, i32
  }
  func.func @transform_2(%arg0: i32) -> (i32, i32) {
    %c0_i32 = arith.constant 0 : i32
    %c0_i32_0 = arith.constant 0 : i32
    %c0_i32_1 = arith.constant 0 : i32
    return %c0_i32, %c0_i32_0 : i32, i32
  }
  func.func @transform_3(%arg0: i32) -> (i32, i32) {
    %c0_i32 = arith.constant 0 : i32
    %c0_i32_0 = arith.constant 0 : i32
    return %arg0, %c0_i32 : i32, i32
  }
}

</mosaic_0001>

<llo_original>
// kernel: tpu_custom_call.1
$region0: #{tpu_custom_call.1}
  #allocation0 [shape = 'u32[]', space=smem, size = 0x4, offset = 0x4, fixed_abs, tag = 'smem constant byte address 0x4 - core index']
  #allocation1 [shape = 'u32[144,128]{1,0:T(1,128)}', space=vmem, size = 0x12000, scoped, tag = 'internal scratch']
  %s0 = inlined_call_operand.vmem [shape: f32[1040,200], index: 0, kind: input, shape index: {}]
  %s1 = inlined_call_operand.vmem [shape: f32[1,200], index: 1, kind: input, shape index: {}]
  %s2 = inlined_call_operand.vmem [shape: f32[1,200], index: 2, kind: input, shape index: {}]
  %s3 = inlined_call_operand.vmem [shape: f32[1040,200], index: 3, kind: output, shape index: {}]
  %s4 = sld [smem:[#allocation0]]
  $region22: #{tpu_custom_call.1} parent=0
    _
  %s6 = ssub.s32 1, %s4
  %s7 = scalar_select 0, %s6, %s4
  // Predicated region
  $region2: #{tpu_custom_call.1} parent=0 // pred_check
    _
  $region3: #{tpu_custom_call.1} parent=0 // pred_check_branch
    %9 = sbr.rel (0) target = $region5
  $region4: #{tpu_custom_call.1} parent=0 // pred_region
    _
  $region5: #{tpu_custom_call.1} parent=0 // pred_fallthru
    _
  // Predicated region
  $region6: #{tpu_custom_call.1} parent=0 // pred_check
    _
  $region7: #{tpu_custom_call.1} parent=0 // pred_check_branch
    %11 = sbr.rel (0) target = $region9
  $region8: #{tpu_custom_call.1} parent=0 // pred_region
    _
  $region9: #{tpu_custom_call.1} parent=0 // pred_fallthru
    _
  // Predicated region
  $region10: #{tpu_custom_call.1} parent=0 // pred_check
    _
  $region11: #{tpu_custom_call.1} parent=0 // pred_check_branch
    %13 = sbr.rel (0) target = $region13
  $region12: #{tpu_custom_call.1} parent=0 // pred_region
    _
  $region13: #{tpu_custom_call.1} parent=0 // pred_fallthru
    _
  %v14 = vld [vmem:[%s0] sm:$0xff]
  %v15 = vld [vmem:[%s0 + $0x8] sm:$0xff]
  %v16 = vld [vmem:[%s0 + $0x10] sm:$0xff]
  %v17 = vld [vmem:[%s0 + $0x18] sm:$0xff]
  %v18 = vld [vmem:[%s0 + $0x20] sm:$0xff]
  %v19 = vld [vmem:[%s0 + $0x28] sm:$0xff]
  %v20 = vld [vmem:[%s0 + $0x30] sm:$0xff]
  %v21 = vld [vmem:[%s0 + $0x38] sm:$0xff]
  %v22 = vld [vmem:[%s0 + $0x40] sm:$0xff]
  %v23 = vld [vmem:[%s0 + $0x48] sm:$0xff]
  %v24 = vld [vmem:[%s0 + $0x50] sm:$0xff]
  %v25 = vld [vmem:[%s0 + $0x58] sm:$0xff]
  %v26 = vld [vmem:[%s0 + $0x60] sm:$0xff]
  %v27 = vld [vmem:[%s0 + $0x68] sm:$0xff]
  %v28 = vld [vmem:[%s0 + $0x70] sm:$0xff]
  %v29 = vld [vmem:[%s0 + $0x78] sm:$0xff]
  %v30 = vld [vmem:[%s0 + $0x80] sm:$0xff]
  %v31 = vld [vmem:[%s0 + $0x88] sm:$0xff]
  %v32 = vld [vmem:[%s0 + $0x90] sm:$0xff]
  %v33 = vld [vmem:[%s0 + $0x98] sm:$0xff]
  %v34 = vld [vmem:[%s0 + $0xa0] sm:$0xff]
  %v35 = vld [vmem:[%s0 + $0xa8] sm:$0xff]
  %v36 = vld [vmem:[%s0 + $0xb0] sm:$0xff]
  %v37 = vld [vmem:[%s0 + $0xb8] sm:$0xff]
  %v38 = vld [vmem:[%s0 + $0xc0] sm:$0xff]
  %v39 = vld [vmem:[%s0 + $0xc8] sm:$0xff]
  %v40 = vld [vmem:[%s0 + $0xd0] sm:$0xff]
  %v41 = vld [vmem:[%s0 + $0xd8] sm:$0xff]
  %v42 = vld [vmem:[%s0 + $0xe0] sm:$0xff]
  %v43 = vld [vmem:[%s0 + $0xe8] sm:$0xff]
  %v44 = vld [vmem:[%s0 + $0xf0] sm:$0xff]
  %v45 = vld [vmem:[%s0 + $0xf8] sm:$0xff]
  %v46 = vld [vmem:[%s0 + $0x100] sm:$0xff]
  %v47 = vld [vmem:[%s0 + $0x108] sm:$0xff]
  %v48 = vld [vmem:[%s0 + $0x110] sm:$0xff]
  %v49 = vld [vmem:[%s0 + $0x118] sm:$0xff]
  %v50 = vld [vmem:[%s0 + $0x120] sm:$0xff]
  %v51 = vld [vmem:[%s0 + $0x128] sm:$0xff]
  %v52 = vld [vmem:[%s0 + $0x130] sm:$0xff]
  %v53 = vld [vmem:[%s0 + $0x138] sm:$0xff]
  %v54 = vld [vmem:[%s0 + $0x140] sm:$0xff]
  %v55 = vld [vmem:[%s0 + $0x148] sm:$0xff]
  %v56 = vld [vmem:[%s0 + $0x150] sm:$0xff]
  %v57 = vld [vmem:[%s0 + $0x158] sm:$0xff]
  %v58 = vld [vmem:[%s0 + $0x160] sm:$0xff]
  %v59 = vld [vmem:[%s0 + $0x168] sm:$0xff]
  %v60 = vld [vmem:[%s0 + $0x170] sm:$0xff]
  %v61 = vld [vmem:[%s0 + $0x178] sm:$0xff]
  %v62 = vld [vmem:[%s0 + $0x180] sm:$0xff]
  %v63 = vld [vmem:[%s0 + $0x188] sm:$0xff]
  %v64 = vld [vmem:[%s0 + $0x190] sm:$0xff]
  %v65 = vld [vmem:[%s0 + $0x198] sm:$0xff]
  %v66 = vld [vmem:[%s0 + $0x1a0] sm:$0xff]
  %v67 = vld [vmem:[%s0 + $0x1a8] sm:$0xff]
  %v68 = vld [vmem:[%s0 + $0x1b0] sm:$0xff]
  %v69 = vld [vmem:[%s0 + $0x1b8] sm:$0xff]
  %v70 = vld [vmem:[%s0 + $0x1c0] sm:$0xff]
  %v71 = vld [vmem:[%s0 + $0x1c8] sm:$0xff]
  %v72 = vld [vmem:[%s0 + $0x1d0] sm:$0xff]
  %v73 = vld [vmem:[%s0 + $0x1d8] sm:$0xff]
  %v74 = vld [vmem:[%s0 + $0x1e0] sm:$0xff]
  %v75 = vld [vmem:[%s0 + $0x1e8] sm:$0xff]
  %v76 = vld [vmem:[%s0 + $0x1f0] sm:$0xff]
  %v77 = vld [vmem:[%s0 + $0x1f8] sm:$0xff]
  %v78 = vld [vmem:[%s0 + $0x200] sm:$0xff]
  %v79 = vld [vmem:[%s0 + $0x208] sm:$0xff]
  %v80 = vld [vmem:[%s0 + $0x210] sm:$0xff]
  %v81 = vld [vmem:[%s0 + $0x218] sm:$0xff]
  %v82 = vld [vmem:[%s0 + $0x220] sm:$0xff]
  %v83 = vld [vmem:[%s0 + $0x228] sm:$0xff]
  %v84 = vld [vmem:[%s0 + $0x230] sm:$0xff]
  %v85 = vld [vmem:[%s0 + $0x238] sm:$0xff]
  %v86 = vld [vmem:[%s0 + $0x240] sm:$0xff]
  %v87 = vld [vmem:[%s0 + $0x248] sm:$0xff]
  %v88 = vld [vmem:[%s0 + $0x250] sm:$0xff]
  %v89 = vld [vmem:[%s0 + $0x258] sm:$0xff]
  %v90 = vld [vmem:[%s0 + $0x260] sm:$0xff]
  %v91 = vld [vmem:[%s0 + $0x268] sm:$0xff]
  %v92 = vld [vmem:[%s0 + $0x270] sm:$0xff]
  %v93 = vld [vmem:[%s0 + $0x278] sm:$0xff]
  %v94 = vld [vmem:[%s0 + $0x280] sm:$0xff]
  %v95 = vld [vmem:[%s0 + $0x288] sm:$0xff]
  %v96 = vld [vmem:[%s0 + $0x290] sm:$0xff]
  %v97 = vld [vmem:[%s0 + $0x298] sm:$0xff]
  %v98 = vld [vmem:[%s0 + $0x2a0] sm:$0xff]
  %v99 = vld [vmem:[%s0 + $0x2a8] sm:$0xff]
  %v100 = vld [vmem:[%s0 + $0x2b0] sm:$0xff]
  %v101 = vld [vmem:[%s0 + $0x2b8] sm:$0xff]
  %v102 = vld [vmem:[%s0 + $0x2c0] sm:$0xff]
  %v103 = vld [vmem:[%s0 + $0x2c8] sm:$0xff]
  %v104 = vld [vmem:[%s0 + $0x2d0] sm:$0xff]
  %v105 = vld [vmem:[%s0 + $0x2d8] sm:$0xff]
  %v106 = vld [vmem:[%s0 + $0x2e0] sm:$0xff]
  %v107 = vld [vmem:[%s0 + $0x2e8] sm:$0xff]
  %v108 = vld [vmem:[%s0 + $0x2f0] sm:$0xff]
  %v109 = vld [vmem:[%s0 + $0x2f8] sm:$0xff]
  %v110 = vld [vmem:[%s0 + $0x300] sm:$0xff]
  %v111 = vld [vmem:[%s0 + $0x308] sm:$0xff]
  %v112 = vld [vmem:[%s0 + $0x310] sm:$0xff]
  %v113 = vld [vmem:[%s0 + $0x318] sm:$0xff]
  %v114 = vld [vmem:[%s0 + $0x320] sm:$0xff]
  %v115 = vld [vmem:[%s0 + $0x328] sm:$0xff]
  %v116 = vld [vmem:[%s0 + $0x330] sm:$0xff]
  %v117 = vld [vmem:[%s0 + $0x338] sm:$0xff]
  %v118 = vld [vmem:[%s0 + $0x340] sm:$0xff]
  %v119 = vld [vmem:[%s0 + $0x348] sm:$0xff]
  %v120 = vld [vmem:[%s0 + $0x350] sm:$0xff]
  %v121 = vld [vmem:[%s0 + $0x358] sm:$0xff]
  %v122 = vld [vmem:[%s0 + $0x360] sm:$0xff]
  %v123 = vld [vmem:[%s0 + $0x368] sm:$0xff]
  %v124 = vld [vmem:[%s0 + $0x370] sm:$0xff]
  %v125 = vld [vmem:[%s0 + $0x378] sm:$0xff]
  %v126 = vld [vmem:[%s0 + $0x380] sm:$0xff]
  %v127 = vld [vmem:[%s0 + $0x388] sm:$0xff]
  %v128 = vld [vmem:[%s0 + $0x390] sm:$0xff]
  %v129 = vld [vmem:[%s0 + $0x398] sm:$0xff]
  %v130 = vld [vmem:[%s0 + $0x3a0] sm:$0xff]
  %v131 = vld [vmem:[%s0 + $0x3a8] sm:$0xff]
  %v132 = vld [vmem:[%s0 + $0x3b0] sm:$0xff]
  %v133 = vld [vmem:[%s0 + $0x3b8] sm:$0xff]
  %v134 = vld [vmem:[%s0 + $0x3c0] sm:$0xff]
  %v135 = vld [vmem:[%s0 + $0x3c8] sm:$0xff]
  %v136 = vld [vmem:[%s0 + $0x3d0] sm:$0xff]
  %v137 = vld [vmem:[%s0 + $0x3d8] sm:$0xff]
  %v138 = vld [vmem:[%s0 + $0x3e0] sm:$0xff]
  %v139 = vld [vmem:[%s0 + $0x3e8] sm:$0xff]
  %v140 = vld [vmem:[%s0 + $0x3f0] sm:$0xff]
  %v141 = vld [vmem:[%s0 + $0x3f8] sm:$0xff]
  %v142 = vld [vmem:[%s0 + $0x400] sm:$0xff]
  %v143 = vld [vmem:[%s0 + $0x408] sm:$0xff]
  %v144 = vld [vmem:[%s0 + $0x410] sm:$0xff]
  %v145 = vld [vmem:[%s0 + $0x418] sm:$0xff]
  %v146 = vld [vmem:[%s0 + $0x420] sm:$0xff]
  %v147 = vld [vmem:[%s0 + $0x428] sm:$0xff]
  %v148 = vld [vmem:[%s0 + $0x430] sm:$0xff]
  %v149 = vld [vmem:[%s0 + $0x438] sm:$0xff]
  %v150 = vld [vmem:[%s0 + $0x440] sm:$0xff]
  %v151 = vld [vmem:[%s0 + $0x448] sm:$0xff]
  %v152 = vld [vmem:[%s0 + $0x450] sm:$0xff]
  %v153 = vld [vmem:[%s0 + $0x458] sm:$0xff]
  %v154 = vld [vmem:[%s0 + $0x460] sm:$0xff]
  %v155 = vld [vmem:[%s0 + $0x468] sm:$0xff]
  %v156 = vld [vmem:[%s0 + $0x470] sm:$0xff]
  %v157 = vld [vmem:[%s0 + $0x478] sm:$0xff]
  %v158 = vld [vmem:[%s0 + $0x480] sm:$0xff]
  %v159 = vld [vmem:[%s0 + $0x488] sm:$0xff]
  %v160 = vld [vmem:[%s0 + $0x490] sm:$0xff]
  %v161 = vld [vmem:[%s0 + $0x498] sm:$0xff]
  %v162 = vld [vmem:[%s0 + $0x4a0] sm:$0xff]
  %v163 = vld [vmem:[%s0 + $0x4a8] sm:$0xff]
  %v164 = vld [vmem:[%s0 + $0x4b0] sm:$0xff]
  %v165 = vld [vmem:[%s0 + $0x4b8] sm:$0xff]
  %v166 = vld [vmem:[%s0 + $0x4c0] sm:$0xff]
  %v167 = vld [vmem:[%s0 + $0x4c8] sm:$0xff]
  %v168 = vld [vmem:[%s0 + $0x4d0] sm:$0xff]
  %v169 = vld [vmem:[%s0 + $0x4d8] sm:$0xff]
  %v170 = vld [vmem:[%s0 + $0x4e0] sm:$0xff]
  %v171 = vld [vmem:[%s0 + $0x4e8] sm:$0xff]
  %v172 = vld [vmem:[%s0 + $0x4f0] sm:$0xff]
  %v173 = vld [vmem:[%s0 + $0x4f8] sm:$0xff]
  %v174 = vld [vmem:[%s0 + $0x500] sm:$0xff]
  %v175 = vld [vmem:[%s0 + $0x508] sm:$0xff]
  %v176 = vld [vmem:[%s0 + $0x510] sm:$0xff]
  %v177 = vld [vmem:[%s0 + $0x518] sm:$0xff]
  %v178 = vld [vmem:[%s0 + $0x520] sm:$0xff]
  %v179 = vld [vmem:[%s0 + $0x528] sm:$0xff]
  %v180 = vld [vmem:[%s0 + $0x530] sm:$0xff]
  %v181 = vld [vmem:[%s0 + $0x538] sm:$0xff]
  %v182 = vld [vmem:[%s0 + $0x540] sm:$0xff]
  %v183 = vld [vmem:[%s0 + $0x548] sm:$0xff]
  %v184 = vld [vmem:[%s0 + $0x550] sm:$0xff]
  %v185 = vld [vmem:[%s0 + $0x558] sm:$0xff]
  %v186 = vld [vmem:[%s0 + $0x560] sm:$0xff]
  %v187 = vld [vmem:[%s0 + $0x568] sm:$0xff]
  %v188 = vld [vmem:[%s0 + $0x570] sm:$0xff]
  %v189 = vld [vmem:[%s0 + $0x578] sm:$0xff]
  %v190 = vld [vmem:[%s0 + $0x580] sm:$0xff]
  %v191 = vld [vmem:[%s0 + $0x588] sm:$0xff]
  %v192 = vld [vmem:[%s0 + $0x590] sm:$0xff]
  %v193 = vld [vmem:[%s0 + $0x598] sm:$0xff]
  %v194 = vld [vmem:[%s0 + $0x5a0] sm:$0xff]
  %v195 = vld [vmem:[%s0 + $0x5a8] sm:$0xff]
  %v196 = vld [vmem:[%s0 + $0x5b0] sm:$0xff]
  %v197 = vld [vmem:[%s0 + $0x5b8] sm:$0xff]
  %v198 = vld [vmem:[%s0 + $0x5c0] sm:$0xff]
  %v199 = vld [vmem:[%s0 + $0x5c8] sm:$0xff]
  %v200 = vld [vmem:[%s0 + $0x5d0] sm:$0xff]
  %v201 = vld [vmem:[%s0 + $0x5d8] sm:$0xff]
  %v202 = vld [vmem:[%s0 + $0x5e0] sm:$0xff]
  %v203 = vld [vmem:[%s0 + $0x5e8] sm:$0xff]
  %v204 = vld [vmem:[%s0 + $0x5f0] sm:$0xff]
  %v205 = vld [vmem:[%s0 + $0x5f8] sm:$0xff]
  %v206 = vld [vmem:[%s0 + $0x600] sm:$0xff]
  %v207 = vld [vmem:[%s0 + $0x608] sm:$0xff]
  %v208 = vld [vmem:[%s0 + $0x610] sm:$0xff]
  %v209 = vld [vmem:[%s0 + $0x618] sm:$0xff]
  %v210 = vld [vmem:[%s0 + $0x620] sm:$0xff]
  %v211 = vld [vmem:[%s0 + $0x628] sm:$0xff]
  %v212 = vld [vmem:[%s0 + $0x630] sm:$0xff]
  %v213 = vld [vmem:[%s0 + $0x638] sm:$0xff]
  %v214 = vld [vmem:[%s0 + $0x640] sm:$0xff]
  %v215 = vld [vmem:[%s0 + $0x648] sm:$0xff]
  %v216 = vld [vmem:[%s0 + $0x650] sm:$0xff]
  %v217 = vld [vmem:[%s0 + $0x658] sm:$0xff]
  %v218 = vld [vmem:[%s0 + $0x660] sm:$0xff]
  %v219 = vld [vmem:[%s0 + $0x668] sm:$0xff]
  %v220 = vld [vmem:[%s0 + $0x670] sm:$0xff]
  %v221 = vld [vmem:[%s0 + $0x678] sm:$0xff]
  %v222 = vld [vmem:[%s0 + $0x680] sm:$0xff]
  %v223 = vld [vmem:[%s0 + $0x688] sm:$0xff]
  %v224 = vld [vmem:[%s0 + $0x690] sm:$0xff]
  %v225 = vld [vmem:[%s0 + $0x698] sm:$0xff]
  %v226 = vld [vmem:[%s0 + $0x6a0] sm:$0xff]
  %v227 = vld [vmem:[%s0 + $0x6a8] sm:$0xff]
  %v228 = vld [vmem:[%s0 + $0x6b0] sm:$0xff]
  %v229 = vld [vmem:[%s0 + $0x6b8] sm:$0xff]
  %v230 = vld [vmem:[%s0 + $0x6c0] sm:$0xff]
  %v231 = vld [vmem:[%s0 + $0x6c8] sm:$0xff]
  %v232 = vld [vmem:[%s0 + $0x6d0] sm:$0xff]
  %v233 = vld [vmem:[%s0 + $0x6d8] sm:$0xff]
  %v234 = vld [vmem:[%s0 + $0x6e0] sm:$0xff]
  %v235 = vld [vmem:[%s0 + $0x6e8] sm:$0xff]
  %v236 = vld [vmem:[%s0 + $0x6f0] sm:$0xff]
  %v237 = vld [vmem:[%s0 + $0x6f8] sm:$0xff]
  %v238 = vld [vmem:[%s0 + $0x700] sm:$0xff]
  %v239 = vld [vmem:[%s0 + $0x708] sm:$0xff]
  %v240 = vld [vmem:[%s0 + $0x710] sm:$0xff]
  %v241 = vld [vmem:[%s0 + $0x718] sm:$0xff]
  %v242 = vld [vmem:[%s0 + $0x720] sm:$0xff]
  %v243 = vld [vmem:[%s0 + $0x728] sm:$0xff]
  %v244 = vld [vmem:[%s0 + $0x730] sm:$0xff]
  %v245 = vld [vmem:[%s0 + $0x738] sm:$0xff]
  %v246 = vld [vmem:[%s0 + $0x740] sm:$0xff]
  %v247 = vld [vmem:[%s0 + $0x748] sm:$0xff]
  %v248 = vld [vmem:[%s0 + $0x750] sm:$0xff]
  %v249 = vld [vmem:[%s0 + $0x758] sm:$0xff]
  %v250 = vld [vmem:[%s0 + $0x760] sm:$0xff]
  %v251 = vld [vmem:[%s0 + $0x768] sm:$0xff]
  %v252 = vld [vmem:[%s0 + $0x770] sm:$0xff]
  %v253 = vld [vmem:[%s0 + $0x778] sm:$0xff]
  %v254 = vld [vmem:[%s0 + $0x780] sm:$0xff]
  %v255 = vld [vmem:[%s0 + $0x788] sm:$0xff]
  %v256 = vld [vmem:[%s0 + $0x790] sm:$0xff]
  %v257 = vld [vmem:[%s0 + $0x798] sm:$0xff]
  %v258 = vld [vmem:[%s0 + $0x7a0] sm:$0xff]
  %v259 = vld [vmem:[%s0 + $0x7a8] sm:$0xff]
  %v260 = vld [vmem:[%s0 + $0x7b0] sm:$0xff]
  %v261 = vld [vmem:[%s0 + $0x7b8] sm:$0xff]
  %v262 = vld [vmem:[%s0 + $0x7c0] sm:$0xff]
  %v263 = vld [vmem:[%s0 + $0x7c8] sm:$0xff]
  %v264 = vld [vmem:[%s0 + $0x7d0] sm:$0xff]
  %v265 = vld [vmem:[%s0 + $0x7d8] sm:$0xff]
  %v266 = vld [vmem:[%s0 + $0x7e0] sm:$0xff]
  %v267 = vld [vmem:[%s0 + $0x7e8] sm:$0xff]
  %v268 = vld [vmem:[%s0 + $0x7f0] sm:$0xff]
  %v269 = vld [vmem:[%s0 + $0x7f8] sm:$0xff]
  %v270 = vld [vmem:[%s0 + $0x800] sm:$0xff]
  %v271 = vld [vmem:[%s0 + $0x808] sm:$0xff]
  %v272 = vld [vmem:[%s0 + $0x810] sm:$0xff]
  %v273 = vld [vmem:[%s0 + $0x818] sm:$0xff]
  %v274 = vld [vmem:[%s1] sm:$0x3]
  %v276 = vlaneseq
  %v277 = vshrl.u32 %v276, 7
  %v278 = vsub.s32 0, %v277
  %v279 = vrot.slane %v274, %v278
  %v280 = vlaneseq
  %v281 = vshrl.u32 %v280, 7
  %v282 = vsub.s32 1, %v281
  %v283 = vrot.slane %v274, %v282
  %v286 = vsub.f32 %v14, %v279
  %v287 = vsub.f32 %v15, %v283
  %v288 = vsub.f32 %v16, %v279
  %v289 = vsub.f32 %v17, %v283
  %v290 = vsub.f32 %v18, %v279
  %v291 = vsub.f32 %v19, %v283
  %v292 = vsub.f32 %v20, %v279
  %v293 = vsub.f32 %v21, %v283
  %v294 = vsub.f32 %v22, %v279
  %v295 = vsub.f32 %v23, %v283
  %v296 = vsub.f32 %v24, %v279
  %v297 = vsub.f32 %v25, %v283
  %v298 = vsub.f32 %v26, %v279
  %v299 = vsub.f32 %v27, %v283
  %v300 = vsub.f32 %v28, %v279
  %v301 = vsub.f32 %v29, %v283
  %v302 = vsub.f32 %v30, %v279
  %v303 = vsub.f32 %v31, %v283
  %v304 = vsub.f32 %v32, %v279
  %v305 = vsub.f32 %v33, %v283
  %v306 = vsub.f32 %v34, %v279
  %v307 = vsub.f32 %v35, %v283
  %v308 = vsub.f32 %v36, %v279
  %v309 = vsub.f32 %v37, %v283
  %v310 = vsub.f32 %v38, %v279
  %v311 = vsub.f32 %v39, %v283
  %v312 = vsub.f32 %v40, %v279
  %v313 = vsub.f32 %v41, %v283
  %v314 = vsub.f32 %v42, %v279
  %v315 = vsub.f32 %v43, %v283
  %v316 = vsub.f32 %v44, %v279
  %v317 = vsub.f32 %v45, %v283
  %v318 = vsub.f32 %v46, %v279
  %v319 = vsub.f32 %v47, %v283
  %v320 = vsub.f32 %v48, %v279
  %v321 = vsub.f32 %v49, %v283
  %v322 = vsub.f32 %v50, %v279
  %v323 = vsub.f32 %v51, %v283
  %v324 = vsub.f32 %v52, %v279
  %v325 = vsub.f32 %v53, %v283
  %v326 = vsub.f32 %v54, %v279
  %v327 = vsub.f32 %v55, %v283
  %v328 = vsub.f32 %v56, %v279
  %v329 = vsub.f32 %v57, %v283
  %v330 = vsub.f32 %v58, %v279
  %v331 = vsub.f32 %v59, %v283
  %v332 = vsub.f32 %v60, %v279
  %v333 = vsub.f32 %v61, %v283
  %v334 = vsub.f32 %v62, %v279
  %v335 = vsub.f32 %v63, %v283
  %v336 = vsub.f32 %v64, %v279
  %v337 = vsub.f32 %v65, %v283
  %v338 = vsub.f32 %v66, %v279
  %v339 = vsub.f32 %v67, %v283
  %v340 = vsub.f32 %v68, %v279
  %v341 = vsub.f32 %v69, %v283
  %v342 = vsub.f32 %v70, %v279
  %v343 = vsub.f32 %v71, %v283
  %v344 = vsub.f32 %v72, %v279
  %v345 = vsub.f32 %v73, %v283
  %v346 = vsub.f32 %v74, %v279
  %v347 = vsub.f32 %v75, %v283
  %v348 = vsub.f32 %v76, %v279
  %v349 = vsub.f32 %v77, %v283
  %v350 = vsub.f32 %v78, %v279
  %v351 = vsub.f32 %v79, %v283
  %v352 = vsub.f32 %v80, %v279
  %v353 = vsub.f32 %v81, %v283
  %v354 = vsub.f32 %v82, %v279
  %v355 = vsub.f32 %v83, %v283
  %v356 = vsub.f32 %v84, %v279
  %v357 = vsub.f32 %v85, %v283
  %v358 = vsub.f32 %v86, %v279
  %v359 = vsub.f32 %v87, %v283
  %v360 = vsub.f32 %v88, %v279
  %v361 = vsub.f32 %v89, %v283
  %v362 = vsub.f32 %v90, %v279
  %v363 = vsub.f32 %v91, %v283
  %v364 = vsub.f32 %v92, %v279
  %v365 = vsub.f32 %v93, %v283
  %v366 = vsub.f32 %v94, %v279
  %v367 = vsub.f32 %v95, %v283
  %v368 = vsub.f32 %v96, %v279
  %v369 = vsub.f32 %v97, %v283
  %v370 = vsub.f32 %v98, %v279
  %v371 = vsub.f32 %v99, %v283
  %v372 = vsub.f32 %v100, %v279
  %v373 = vsub.f32 %v101, %v283
  %v374 = vsub.f32 %v102, %v279
  %v375 = vsub.f32 %v103, %v283
  %v376 = vsub.f32 %v104, %v279
  %v377 = vsub.f32 %v105, %v283
  %v378 = vsub.f32 %v106, %v279
  %v379 = vsub.f32 %v107, %v283
  %v380 = vsub.f32 %v108, %v279
  %v381 = vsub.f32 %v109, %v283
  %v382 = vsub.f32 %v110, %v279
  %v383 = vsub.f32 %v111, %v283
  %v384 = vsub.f32 %v112, %v279
  %v385 = vsub.f32 %v113, %v283
  %v386 = vsub.f32 %v114, %v279
  %v387 = vsub.f32 %v115, %v283
  %v388 = vsub.f32 %v116, %v279
  %v389 = vsub.f32 %v117, %v283
  %v390 = vsub.f32 %v118, %v279
  %v391 = vsub.f32 %v119, %v283
  %v392 = vsub.f32 %v120, %v279
  %v393 = vsub.f32 %v121, %v283
  %v394 = vsub.f32 %v122, %v279
  %v395 = vsub.f32 %v123, %v283
  %v396 = vsub.f32 %v124, %v279
  %v397 = vsub.f32 %v125, %v283
  %v398 = vsub.f32 %v126, %v279
  %v399 = vsub.f32 %v127, %v283
  %v400 = vsub.f32 %v128, %v279
  %v401 = vsub.f32 %v129, %v283
  %v402 = vsub.f32 %v130, %v279
  %v403 = vsub.f32 %v131, %v283
  %v404 = vsub.f32 %v132, %v279
  %v405 = vsub.f32 %v133, %v283
  %v406 = vsub.f32 %v134, %v279
  %v407 = vsub.f32 %v135, %v283
  %v408 = vsub.f32 %v136, %v279
  %v409 = vsub.f32 %v137, %v283
  %v410 = vsub.f32 %v138, %v279
  %v411 = vsub.f32 %v139, %v283
  %v412 = vsub.f32 %v140, %v279
  %v413 = vsub.f32 %v141, %v283
  %v414 = vsub.f32 %v142, %v279
  %v415 = vsub.f32 %v143, %v283
  %v416 = vsub.f32 %v144, %v279
  %v417 = vsub.f32 %v145, %v283
  %v418 = vsub.f32 %v146, %v279
  %v419 = vsub.f32 %v147, %v283
  %v420 = vsub.f32 %v148, %v279
  %v421 = vsub.f32 %v149, %v283
  %v422 = vsub.f32 %v150, %v279
  %v423 = vsub.f32 %v151, %v283
  %v424 = vsub.f32 %v152, %v279
  %v425 = vsub.f32 %v153, %v283
  %v426 = vsub.f32 %v154, %v279
  %v427 = vsub.f32 %v155, %v283
  %v428 = vsub.f32 %v156, %v279
  %v429 = vsub.f32 %v157, %v283
  %v430 = vsub.f32 %v158, %v279
  %v431 = vsub.f32 %v159, %v283
  %v432 = vsub.f32 %v160, %v279
  %v433 = vsub.f32 %v161, %v283
  %v434 = vsub.f32 %v162, %v279
  %v435 = vsub.f32 %v163, %v283
  %v436 = vsub.f32 %v164, %v279
  %v437 = vsub.f32 %v165, %v283
  %v438 = vsub.f32 %v166, %v279
  %v439 = vsub.f32 %v167, %v283
  %v440 = vsub.f32 %v168, %v279
  %v441 = vsub.f32 %v169, %v283
  %v442 = vsub.f32 %v170, %v279
  %v443 = vsub.f32 %v171, %v283
  %v444 = vsub.f32 %v172, %v279
  %v445 = vsub.f32 %v173, %v283
  %v446 = vsub.f32 %v174, %v279
  %v447 = vsub.f32 %v175, %v283
  %v448 = vsub.f32 %v176, %v279
  %v449 = vsub.f32 %v177, %v283
  %v450 = vsub.f32 %v178, %v279
  %v451 = vsub.f32 %v179, %v283
  %v452 = vsub.f32 %v180, %v279
  %v453 = vsub.f32 %v181, %v283
  %v454 = vsub.f32 %v182, %v279
  %v455 = vsub.f32 %v183, %v283
  %v456 = vsub.f32 %v184, %v279
  %v457 = vsub.f32 %v185, %v283
  %v458 = vsub.f32 %v186, %v279
  %v459 = vsub.f32 %v187, %v283
  %v460 = vsub.f32 %v188, %v279
  %v461 = vsub.f32 %v189, %v283
  %v462 = vsub.f32 %v190, %v279
  %v463 = vsub.f32 %v191, %v283
  %v464 = vsub.f32 %v192, %v279
  %v465 = vsub.f32 %v193, %v283
  %v466 = vsub.f32 %v194, %v279
  %v467 = vsub.f32 %v195, %v283
  %v468 = vsub.f32 %v196, %v279
  %v469 = vsub.f32 %v197, %v283
  %v470 = vsub.f32 %v198, %v279
  %v471 = vsub.f32 %v199, %v283
  %v472 = vsub.f32 %v200, %v279
  %v473 = vsub.f32 %v201, %v283
  %v474 = vsub.f32 %v202, %v279
  %v475 = vsub.f32 %v203, %v283
  %v476 = vsub.f32 %v204, %v279
  %v477 = vsub.f32 %v205, %v283
  %v478 = vsub.f32 %v206, %v279
  %v479 = vsub.f32 %v207, %v283
  %v480 = vsub.f32 %v208, %v279
  %v481 = vsub.f32 %v209, %v283
  %v482 = vsub.f32 %v210, %v279
  %v483 = vsub.f32 %v211, %v283
  %v484 = vsub.f32 %v212, %v279
  %v485 = vsub.f32 %v213, %v283
  %v486 = vsub.f32 %v214, %v279
  %v487 = vsub.f32 %v215, %v283
  %v488 = vsub.f32 %v216, %v279
  %v489 = vsub.f32 %v217, %v283
  %v490 = vsub.f32 %v218, %v279
  %v491 = vsub.f32 %v219, %v283
  %v492 = vsub.f32 %v220, %v279
  %v493 = vsub.f32 %v221, %v283
  %v494 = vsub.f32 %v222, %v279
  %v495 = vsub.f32 %v223, %v283
  %v496 = vsub.f32 %v224, %v279
  %v497 = vsub.f32 %v225, %v283
  %v498 = vsub.f32 %v226, %v279
  %v499 = vsub.f32 %v227, %v283
  %v500 = vsub.f32 %v228, %v279
  %v501 = vsub.f32 %v229, %v283
  %v502 = vsub.f32 %v230, %v279
  %v503 = vsub.f32 %v231, %v283
  %v504 = vsub.f32 %v232, %v279
  %v505 = vsub.f32 %v233, %v283
  %v506 = vsub.f32 %v234, %v279
  %v507 = vsub.f32 %v235, %v283
  %v508 = vsub.f32 %v236, %v279
  %v509 = vsub.f32 %v237, %v283
  %v510 = vsub.f32 %v238, %v279
  %v511 = vsub.f32 %v239, %v283
  %v512 = vsub.f32 %v240, %v279
  %v513 = vsub.f32 %v241, %v283
  %v514 = vsub.f32 %v242, %v279
  %v515 = vsub.f32 %v243, %v283
  %v516 = vsub.f32 %v244, %v279
  %v517 = vsub.f32 %v245, %v283
  %v518 = vsub.f32 %v246, %v279
  %v519 = vsub.f32 %v247, %v283
  %v520 = vsub.f32 %v248, %v279
  %v521 = vsub.f32 %v249, %v283
  %v522 = vsub.f32 %v250, %v279
  %v523 = vsub.f32 %v251, %v283
  %v524 = vsub.f32 %v252, %v279
  %v525 = vsub.f32 %v253, %v283
  %v526 = vsub.f32 %v254, %v279
  %v527 = vsub.f32 %v255, %v283
  %v528 = vsub.f32 %v256, %v279
  %v529 = vsub.f32 %v257, %v283
  %v530 = vsub.f32 %v258, %v279
  %v531 = vsub.f32 %v259, %v283
  %v532 = vsub.f32 %v260, %v279
  %v533 = vsub.f32 %v261, %v283
  %v534 = vsub.f32 %v262, %v279
  %v535 = vsub.f32 %v263, %v283
  %v536 = vsub.f32 %v264, %v279
  %v537 = vsub.f32 %v265, %v283
  %v538 = vsub.f32 %v266, %v279
  %v539 = vsub.f32 %v267, %v283
  %v540 = vsub.f32 %v268, %v279
  %v541 = vsub.f32 %v269, %v283
  %v542 = vsub.f32 %v270, %v279
  %v543 = vsub.f32 %v271, %v283
  %v544 = vsub.f32 %v272, %v279
  %v545 = vsub.f32 %v273, %v283
  %v546 = vld [vmem:[%s2] sm:$0x3]
  %v548 = vlaneseq
  %v549 = vshrl.u32 %v548, 7
  %v550 = vsub.s32 0, %v549
  %v551 = vrot.slane %v546, %v550
  %v552 = vlaneseq
  %v553 = vshrl.u32 %v552, 7
  %v554 = vsub.s32 1, %v553
  %v555 = vrot.slane %v546, %v554
  %v558 = vmul.f32 %v286, %v551
  %v559 = vmul.f32 %v287, %v555
  %v560 = vmul.f32 %v288, %v551
  %v561 = vmul.f32 %v289, %v555
  %v562 = vmul.f32 %v290, %v551
  %v563 = vmul.f32 %v291, %v555
  %v564 = vmul.f32 %v292, %v551
  %v565 = vmul.f32 %v293, %v555
  %v566 = vmul.f32 %v294, %v551
  %v567 = vmul.f32 %v295, %v555
  %v568 = vmul.f32 %v296, %v551
  %v569 = vmul.f32 %v297, %v555
  %v570 = vmul.f32 %v298, %v551
  %v571 = vmul.f32 %v299, %v555
  %v572 = vmul.f32 %v300, %v551
  %v573 = vmul.f32 %v301, %v555
  %v574 = vmul.f32 %v302, %v551
  %v575 = vmul.f32 %v303, %v555
  %v576 = vmul.f32 %v304, %v551
  %v577 = vmul.f32 %v305, %v555
  %v578 = vmul.f32 %v306, %v551
  %v579 = vmul.f32 %v307, %v555
  %v580 = vmul.f32 %v308, %v551
  %v581 = vmul.f32 %v309, %v555
  %v582 = vmul.f32 %v310, %v551
  %v583 = vmul.f32 %v311, %v555
  %v584 = vmul.f32 %v312, %v551
  %v585 = vmul.f32 %v313, %v555
  %v586 = vmul.f32 %v314, %v551
  %v587 = vmul.f32 %v315, %v555
  %v588 = vmul.f32 %v316, %v551
  %v589 = vmul.f32 %v317, %v555
  %v590 = vmul.f32 %v318, %v551
  %v591 = vmul.f32 %v319, %v555
  %v592 = vmul.f32 %v320, %v551
  %v593 = vmul.f32 %v321, %v555
  %v594 = vmul.f32 %v322, %v551
  %v595 = vmul.f32 %v323, %v555
  %v596 = vmul.f32 %v324, %v551
  %v597 = vmul.f32 %v325, %v555
  %v598 = vmul.f32 %v326, %v551
  %v599 = vmul.f32 %v327, %v555
  %v600 = vmul.f32 %v328, %v551
  %v601 = vmul.f32 %v329, %v555
  %v602 = vmul.f32 %v330, %v551
  %v603 = vmul.f32 %v331, %v555
  %v604 = vmul.f32 %v332, %v551
  %v605 = vmul.f32 %v333, %v555
  %v606 = vmul.f32 %v334, %v551
  %v607 = vmul.f32 %v335, %v555
  %v608 = vmul.f32 %v336, %v551
  %v609 = vmul.f32 %v337, %v555
  %v610 = vmul.f32 %v338, %v551
  %v611 = vmul.f32 %v339, %v555
  %v612 = vmul.f32 %v340, %v551
  %v613 = vmul.f32 %v341, %v555
  %v614 = vmul.f32 %v342, %v551
  %v615 = vmul.f32 %v343, %v555
  %v616 = vmul.f32 %v344, %v551
  %v617 = vmul.f32 %v345, %v555
  %v618 = vmul.f32 %v346, %v551
  %v619 = vmul.f32 %v347, %v555
  %v620 = vmul.f32 %v348, %v551
  %v621 = vmul.f32 %v349, %v555
  %v622 = vmul.f32 %v350, %v551
  %v623 = vmul.f32 %v351, %v555
  %v624 = vmul.f32 %v352, %v551
  %v625 = vmul.f32 %v353, %v555
  %v626 = vmul.f32 %v354, %v551
  %v627 = vmul.f32 %v355, %v555
  %v628 = vmul.f32 %v356, %v551
  %v629 = vmul.f32 %v357, %v555
  %v630 = vmul.f32 %v358, %v551
  %v631 = vmul.f32 %v359, %v555
  %v632 = vmul.f32 %v360, %v551
  %v633 = vmul.f32 %v361, %v555
  %v634 = vmul.f32 %v362, %v551
  %v635 = vmul.f32 %v363, %v555
  %v636 = vmul.f32 %v364, %v551
  %v637 = vmul.f32 %v365, %v555
  %v638 = vmul.f32 %v366, %v551
  %v639 = vmul.f32 %v367, %v555
  %v640 = vmul.f32 %v368, %v551
  %v641 = vmul.f32 %v369, %v555
  %v642 = vmul.f32 %v370, %v551
  %v643 = vmul.f32 %v371, %v555
  %v644 = vmul.f32 %v372, %v551
  %v645 = vmul.f32 %v373, %v555
  %v646 = vmul.f32 %v374, %v551
  %v647 = vmul.f32 %v375, %v555
  %v648 = vmul.f32 %v376, %v551
  %v649 = vmul.f32 %v377, %v555
  %v650 = vmul.f32 %v378, %v551
  %v651 = vmul.f32 %v379, %v555
  %v652 = vmul.f32 %v380, %v551
  %v653 = vmul.f32 %v381, %v555
  %v654 = vmul.f32 %v382, %v551
  %v655 = vmul.f32 %v383, %v555
  %v656 = vmul.f32 %v384, %v551
  %v657 = vmul.f32 %v385, %v555
  %v658 = vmul.f32 %v386, %v551
  %v659 = vmul.f32 %v387, %v555
  %v660 = vmul.f32 %v388, %v551
  %v661 = vmul.f32 %v389, %v555
  %v662 = vmul.f32 %v390, %v551
  %v663 = vmul.f32 %v391, %v555
  %v664 = vmul.f32 %v392, %v551
  %v665 = vmul.f32 %v393, %v555
  %v666 = vmul.f32 %v394, %v551
  %v667 = vmul.f32 %v395, %v555
  %v668 = vmul.f32 %v396, %v551
  %v669 = vmul.f32 %v397, %v555
  %v670 = vmul.f32 %v398, %v551
  %v671 = vmul.f32 %v399, %v555
  %v672 = vmul.f32 %v400, %v551
  %v673 = vmul.f32 %v401, %v555
  %v674 = vmul.f32 %v402, %v551
  %v675 = vmul.f32 %v403, %v555
  %v676 = vmul.f32 %v404, %v551
  %v677 = vmul.f32 %v405, %v555
  %v678 = vmul.f32 %v406, %v551
  %v679 = vmul.f32 %v407, %v555
  %v680 = vmul.f32 %v408, %v551
  %v681 = vmul.f32 %v409, %v555
  %v682 = vmul.f32 %v410, %v551
  %v683 = vmul.f32 %v411, %v555
  %v684 = vmul.f32 %v412, %v551
  %v685 = vmul.f32 %v413, %v555
  %v686 = vmul.f32 %v414, %v551
  %v687 = vmul.f32 %v415, %v555
  %v688 = vmul.f32 %v416, %v551
  %v689 = vmul.f32 %v417, %v555
  %v690 = vmul.f32 %v418, %v551
  %v691 = vmul.f32 %v419, %v555
  %v692 = vmul.f32 %v420, %v551
  %v693 = vmul.f32 %v421, %v555
  %v694 = vmul.f32 %v422, %v551
  %v695 = vmul.f32 %v423, %v555
  %v696 = vmul.f32 %v424, %v551
  %v697 = vmul.f32 %v425, %v555
  %v698 = vmul.f32 %v426, %v551
  %v699 = vmul.f32 %v427, %v555
  %v700 = vmul.f32 %v428, %v551
  %v701 = vmul.f32 %v429, %v555
  %v702 = vmul.f32 %v430, %v551
  %v703 = vmul.f32 %v431, %v555
  %v704 = vmul.f32 %v432, %v551
  %v705 = vmul.f32 %v433, %v555
  %v706 = vmul.f32 %v434, %v551
  %v707 = vmul.f32 %v435, %v555
  %v708 = vmul.f32 %v436, %v551
  %v709 = vmul.f32 %v437, %v555
  %v710 = vmul.f32 %v438, %v551
  %v711 = vmul.f32 %v439, %v555
  %v712 = vmul.f32 %v440, %v551
  %v713 = vmul.f32 %v441, %v555
  %v714 = vmul.f32 %v442, %v551
  %v715 = vmul.f32 %v443, %v555
  %v716 = vmul.f32 %v444, %v551
  %v717 = vmul.f32 %v445, %v555
  %v718 = vmul.f32 %v446, %v551
  %v719 = vmul.f32 %v447, %v555
  %v720 = vmul.f32 %v448, %v551
  %v721 = vmul.f32 %v449, %v555
  %v722 = vmul.f32 %v450, %v551
  %v723 = vmul.f32 %v451, %v555
  %v724 = vmul.f32 %v452, %v551
  %v725 = vmul.f32 %v453, %v555
  %v726 = vmul.f32 %v454, %v551
  %v727 = vmul.f32 %v455, %v555
  %v728 = vmul.f32 %v456, %v551
  %v729 = vmul.f32 %v457, %v555
  %v730 = vmul.f32 %v458, %v551
  %v731 = vmul.f32 %v459, %v555
  %v732 = vmul.f32 %v460, %v551
  %v733 = vmul.f32 %v461, %v555
  %v734 = vmul.f32 %v462, %v551
  %v735 = vmul.f32 %v463, %v555
  %v736 = vmul.f32 %v464, %v551
  %v737 = vmul.f32 %v465, %v555
  %v738 = vmul.f32 %v466, %v551
  %v739 = vmul.f32 %v467, %v555
  %v740 = vmul.f32 %v468, %v551
  %v741 = vmul.f32 %v469, %v555
  %v742 = vmul.f32 %v470, %v551
  %v743 = vmul.f32 %v471, %v555
  %v744 = vmul.f32 %v472, %v551
  %v745 = vmul.f32 %v473, %v555
  %v746 = vmul.f32 %v474, %v551
  %v747 = vmul.f32 %v475, %v555
  %v748 = vmul.f32 %v476, %v551
  %v749 = vmul.f32 %v477, %v555
  %v750 = vmul.f32 %v478, %v551
  %v751 = vmul.f32 %v479, %v555
  %v752 = vmul.f32 %v480, %v551
  %v753 = vmul.f32 %v481, %v555
  %v754 = vmul.f32 %v482, %v551
  %v755 = vmul.f32 %v483, %v555
  %v756 = vmul.f32 %v484, %v551
  %v757 = vmul.f32 %v485, %v555
  %v758 = vmul.f32 %v486, %v551
  %v759 = vmul.f32 %v487, %v555
  %v760 = vmul.f32 %v488, %v551
  %v761 = vmul.f32 %v489, %v555
  %v762 = vmul.f32 %v490, %v551
  %v763 = vmul.f32 %v491, %v555
  %v764 = vmul.f32 %v492, %v551
  %v765 = vmul.f32 %v493, %v555
  %v766 = vmul.f32 %v494, %v551
  %v767 = vmul.f32 %v495, %v555
  %v768 = vmul.f32 %v496, %v551
  %v769 = vmul.f32 %v497, %v555
  %v770 = vmul.f32 %v498, %v551
  %v771 = vmul.f32 %v499, %v555
  %v772 = vmul.f32 %v500, %v551
  %v773 = vmul.f32 %v501, %v555
  %v774 = vmul.f32 %v502, %v551
  %v775 = vmul.f32 %v503, %v555
  %v776 = vmul.f32 %v504, %v551
  %v777 = vmul.f32 %v505, %v555
  %v778 = vmul.f32 %v506, %v551
  %v779 = vmul.f32 %v507, %v555
  %v780 = vmul.f32 %v508, %v551
  %v781 = vmul.f32 %v509, %v555
  %v782 = vmul.f32 %v510, %v551
  %v783 = vmul.f32 %v511, %v555
  %v784 = vmul.f32 %v512, %v551
  %v785 = vmul.f32 %v513, %v555
  %v786 = vmul.f32 %v514, %v551
  %v787 = vmul.f32 %v515, %v555
  %v788 = vmul.f32 %v516, %v551
  %v789 = vmul.f32 %v517, %v555
  %v790 = vmul.f32 %v518, %v551
  %v791 = vmul.f32 %v519, %v555
  %v792 = vmul.f32 %v520, %v551
  %v793 = vmul.f32 %v521, %v555
  %v794 = vmul.f32 %v522, %v551
  %v795 = vmul.f32 %v523, %v555
  %v796 = vmul.f32 %v524, %v551
  %v797 = vmul.f32 %v525, %v555
  %v798 = vmul.f32 %v526, %v551
  %v799 = vmul.f32 %v527, %v555
  %v800 = vmul.f32 %v528, %v551
  %v801 = vmul.f32 %v529, %v555
  %v802 = vmul.f32 %v530, %v551
  %v803 = vmul.f32 %v531, %v555
  %v804 = vmul.f32 %v532, %v551
  %v805 = vmul.f32 %v533, %v555
  %v806 = vmul.f32 %v534, %v551
  %v807 = vmul.f32 %v535, %v555
  %v808 = vmul.f32 %v536, %v551
  %v809 = vmul.f32 %v537, %v555
  %v810 = vmul.f32 %v538, %v551
  %v811 = vmul.f32 %v539, %v555
  %v812 = vmul.f32 %v540, %v551
  %v813 = vmul.f32 %v541, %v555
  %v814 = vmul.f32 %v542, %v551
  %v815 = vmul.f32 %v543, %v555
  %v816 = vmul.f32 %v544, %v551
  %v817 = vmul.f32 %v545, %v555
  %v818 = vmax.f32 %v558, -10.0
  %v819 = vmax.f32 %v559, -10.0
  %v820 = vmax.f32 %v560, -10.0
  %v821 = vmax.f32 %v561, -10.0
  %v822 = vmax.f32 %v562, -10.0
  %v823 = vmax.f32 %v563, -10.0
  %v824 = vmax.f32 %v564, -10.0
  %v825 = vmax.f32 %v565, -10.0
  %v826 = vmax.f32 %v566, -10.0
  %v827 = vmax.f32 %v567, -10.0
  %v828 = vmax.f32 %v568, -10.0
  %v829 = vmax.f32 %v569, -10.0
  %v830 = vmax.f32 %v570, -10.0
  %v831 = vmax.f32 %v571, -10.0
  %v832 = vmax.f32 %v572, -10.0
  %v833 = vmax.f32 %v573, -10.0
  %v834 = vmax.f32 %v574, -10.0
  %v835 = vmax.f32 %v575, -10.0
  %v836 = vmax.f32 %v576, -10.0
  %v837 = vmax.f32 %v577, -10.0
  %v838 = vmax.f32 %v578, -10.0
  %v839 = vmax.f32 %v579, -10.0
  %v840 = vmax.f32 %v580, -10.0
  %v841 = vmax.f32 %v581, -10.0
  %v842 = vmax.f32 %v582, -10.0
  %v843 = vmax.f32 %v583, -10.0
  %v844 = vmax.f32 %v584, -10.0
  %v845 = vmax.f32 %v585, -10.0
  %v846 = vmax.f32 %v586, -10.0
  %v847 = vmax.f32 %v587, -10.0
  %v848 = vmax.f32 %v588, -10.0
  %v849 = vmax.f32 %v589, -10.0
  %v850 = vmax.f32 %v590, -10.0
  %v851 = vmax.f32 %v591, -10.0
  %v852 = vmax.f32 %v592, -10.0
  %v853 = vmax.f32 %v593, -10.0
  %v854 = vmax.f32 %v594, -10.0
  %v855 = vmax.f32 %v595, -10.0
  %v856 = vmax.f32 %v596, -10.0
  %v857 = vmax.f32 %v597, -10.0
  %v858 = vmax.f32 %v598, -10.0
  %v859 = vmax.f32 %v599, -10.0
  %v860 = vmax.f32 %v600, -10.0
  %v861 = vmax.f32 %v601, -10.0
  %v862 = vmax.f32 %v602, -10.0
  %v863 = vmax.f32 %v603, -10.0
  %v864 = vmax.f32 %v604, -10.0
  %v865 = vmax.f32 %v605, -10.0
  %v866 = vmax.f32 %v606, -10.0
  %v867 = vmax.f32 %v607, -10.0
  %v868 = vmax.f32 %v608, -10.0
  %v869 = vmax.f32 %v609, -10.0
  %v870 = vmax.f32 %v610, -10.0
  %v871 = vmax.f32 %v611, -10.0
  %v872 = vmax.f32 %v612, -10.0
  %v873 = vmax.f32 %v613, -10.0
  %v874 = vmax.f32 %v614, -10.0
  %v875 = vmax.f32 %v615, -10.0
  %v876 = vmax.f32 %v616, -10.0
  %v877 = vmax.f32 %v617, -10.0
  %v878 = vmax.f32 %v618, -10.0
  %v879 = vmax.f32 %v619, -10.0
  %v880 = vmax.f32 %v620, -10.0
  %v881 = vmax.f32 %v621, -10.0
  %v882 = vmax.f32 %v622, -10.0
  %v883 = vmax.f32 %v623, -10.0
  %v884 = vmax.f32 %v624, -10.0
  %v885 = vmax.f32 %v625, -10.0
  %v886 = vmax.f32 %v626, -10.0
  %v887 = vmax.f32 %v627, -10.0
  %v888 = vmax.f32 %v628, -10.0
  %v889 = vmax.f32 %v629, -10.0
  %v890 = vmax.f32 %v630, -10.0
  %v891 = vmax.f32 %v631, -10.0
  %v892 = vmax.f32 %v632, -10.0
  %v893 = vmax.f32 %v633, -10.0
  %v894 = vmax.f32 %v634, -10.0
  %v895 = vmax.f32 %v635, -10.0
  %v896 = vmax.f32 %v636, -10.0
  %v897 = vmax.f32 %v637, -10.0
  %v898 = vmax.f32 %v638, -10.0
  %v899 = vmax.f32 %v639, -10.0
  %v900 = vmax.f32 %v640, -10.0
  %v901 = vmax.f32 %v641, -10.0
  %v902 = vmax.f32 %v642, -10.0
  %v903 = vmax.f32 %v643, -10.0
  %v904 = vmax.f32 %v644, -10.0
  %v905 = vmax.f32 %v645, -10.0
  %v906 = vmax.f32 %v646, -10.0
  %v907 = vmax.f32 %v647, -10.0
  %v908 = vmax.f32 %v648, -10.0
  %v909 = vmax.f32 %v649, -10.0
  %v910 = vmax.f32 %v650, -10.0
  %v911 = vmax.f32 %v651, -10.0
  %v912 = vmax.f32 %v652, -10.0
  %v913 = vmax.f32 %v653, -10.0
  %v914 = vmax.f32 %v654, -10.0
  %v915 = vmax.f32 %v655, -10.0
  %v916 = vmax.f32 %v656, -10.0
  %v917 = vmax.f32 %v657, -10.0
  %v918 = vmax.f32 %v658, -10.0
  %v919 = vmax.f32 %v659, -10.0
  %v920 = vmax.f32 %v660, -10.0
  %v921 = vmax.f32 %v661, -10.0
  %v922 = vmax.f32 %v662, -10.0
  %v923 = vmax.f32 %v663, -10.0
  %v924 = vmax.f32 %v664, -10.0
  %v925 = vmax.f32 %v665, -10.0
  %v926 = vmax.f32 %v666, -10.0
  %v927 = vmax.f32 %v667, -10.0
  %v928 = vmax.f32 %v668, -10.0
  %v929 = vmax.f32 %v669, -10.0
  %v930 = vmax.f32 %v670, -10.0
  %v931 = vmax.f32 %v671, -10.0
  %v932 = vmax.f32 %v672, -10.0
  %v933 = vmax.f32 %v673, -10.0
  %v934 = vmax.f32 %v674, -10.0
  %v935 = vmax.f32 %v675, -10.0
  %v936 = vmax.f32 %v676, -10.0
  %v937 = vmax.f32 %v677, -10.0
  %v938 = vmax.f32 %v678, -10.0
  %v939 = vmax.f32 %v679, -10.0
  %v940 = vmax.f32 %v680, -10.0
  %v941 = vmax.f32 %v681, -10.0
  %v942 = vmax.f32 %v682, -10.0
  %v943 = vmax.f32 %v683, -10.0
  %v944 = vmax.f32 %v684, -10.0
  %v945 = vmax.f32 %v685, -10.0
  %v946 = vmax.f32 %v686, -10.0
  %v947 = vmax.f32 %v687, -10.0
  %v948 = vmax.f32 %v688, -10.0
  %v949 = vmax.f32 %v689, -10.0
  %v950 = vmax.f32 %v690, -10.0
  %v951 = vmax.f32 %v691, -10.0
  %v952 = vmax.f32 %v692, -10.0
  %v953 = vmax.f32 %v693, -10.0
  %v954 = vmax.f32 %v694, -10.0
  %v955 = vmax.f32 %v695, -10.0
  %v956 = vmax.f32 %v696, -10.0
  %v957 = vmax.f32 %v697, -10.0
  %v958 = vmax.f32 %v698, -10.0
  %v959 = vmax.f32 %v699, -10.0
  %v960 = vmax.f32 %v700, -10.0
  %v961 = vmax.f32 %v701, -10.0
  %v962 = vmax.f32 %v702, -10.0
  %v963 = vmax.f32 %v703, -10.0
  %v964 = vmax.f32 %v704, -10.0
  %v965 = vmax.f32 %v705, -10.0
  %v966 = vmax.f32 %v706, -10.0
  %v967 = vmax.f32 %v707, -10.0
  %v968 = vmax.f32 %v708, -10.0
  %v969 = vmax.f32 %v709, -10.0
  %v970 = vmax.f32 %v710, -10.0
  %v971 = vmax.f32 %v711, -10.0
  %v972 = vmax.f32 %v712, -10.0
  %v973 = vmax.f32 %v713, -10.0
  %v974 = vmax.f32 %v714, -10.0
  %v975 = vmax.f32 %v715, -10.0
  %v976 = vmax.f32 %v716, -10.0
  %v977 = vmax.f32 %v717, -10.0
  %v978 = vmax.f32 %v718, -10.0
  %v979 = vmax.f32 %v719, -10.0
  %v980 = vmax.f32 %v720, -10.0
  %v981 = vmax.f32 %v721, -10.0
  %v982 = vmax.f32 %v722, -10.0
  %v983 = vmax.f32 %v723, -10.0
  %v984 = vmax.f32 %v724, -10.0
  %v985 = vmax.f32 %v725, -10.0
  %v986 = vmax.f32 %v726, -10.0
  %v987 = vmax.f32 %v727, -10.0
  %v988 = vmax.f32 %v728, -10.0
  %v989 = vmax.f32 %v729, -10.0
  %v990 = vmax.f32 %v730, -10.0
  %v991 = vmax.f32 %v731, -10.0
  %v992 = vmax.f32 %v732, -10.0
  %v993 = vmax.f32 %v733, -10.0
  %v994 = vmax.f32 %v734, -10.0
  %v995 = vmax.f32 %v735, -10.0
  %v996 = vmax.f32 %v736, -10.0
  %v997 = vmax.f32 %v737, -10.0
  %v998 = vmax.f32 %v738, -10.0
  %v999 = vmax.f32 %v739, -10.0
  %v1000 = vmax.f32 %v740, -10.0
  %v1001 = vmax.f32 %v741, -10.0
  %v1002 = vmax.f32 %v742, -10.0
  %v1003 = vmax.f32 %v743, -10.0
  %v1004 = vmax.f32 %v744, -10.0
  %v1005 = vmax.f32 %v745, -10.0
  %v1006 = vmax.f32 %v746, -10.0
  %v1007 = vmax.f32 %v747, -10.0
  %v1008 = vmax.f32 %v748, -10.0
  %v1009 = vmax.f32 %v749, -10.0
  %v1010 = vmax.f32 %v750, -10.0
  %v1011 = vmax.f32 %v751, -10.0
  %v1012 = vmax.f32 %v752, -10.0
  %v1013 = vmax.f32 %v753, -10.0
  %v1014 = vmax.f32 %v754, -10.0
  %v1015 = vmax.f32 %v755, -10.0
  %v1016 = vmax.f32 %v756, -10.0
  %v1017 = vmax.f32 %v757, -10.0
  %v1018 = vmax.f32 %v758, -10.0
  %v1019 = vmax.f32 %v759, -10.0
  %v1020 = vmax.f32 %v760, -10.0
  %v1021 = vmax.f32 %v761, -10.0
  %v1022 = vmax.f32 %v762, -10.0
  %v1023 = vmax.f32 %v763, -10.0
  %v1024 = vmax.f32 %v764, -10.0
  %v1025 = vmax.f32 %v765, -10.0
  %v1026 = vmax.f32 %v766, -10.0
  %v1027 = vmax.f32 %v767, -10.0
  %v1028 = vmax.f32 %v768, -10.0
  %v1029 = vmax.f32 %v769, -10.0
  %v1030 = vmax.f32 %v770, -10.0
  %v1031 = vmax.f32 %v771, -10.0
  %v1032 = vmax.f32 %v772, -10.0
  %v1033 = vmax.f32 %v773, -10.0
  %v1034 = vmax.f32 %v774, -10.0
  %v1035 = vmax.f32 %v775, -10.0
  %v1036 = vmax.f32 %v776, -10.0
  %v1037 = vmax.f32 %v777, -10.0
  %v1038 = vmax.f32 %v778, -10.0
  %v1039 = vmax.f32 %v779, -10.0
  %v1040 = vmax.f32 %v780, -10.0
  %v1041 = vmax.f32 %v781, -10.0
  %v1042 = vmax.f32 %v782, -10.0
  %v1043 = vmax.f32 %v783, -10.0
  %v1044 = vmax.f32 %v784, -10.0
  %v1045 = vmax.f32 %v785, -10.0
  %v1046 = vmax.f32 %v786, -10.0
  %v1047 = vmax.f32 %v787, -10.0
  %v1048 = vmax.f32 %v788, -10.0
  %v1049 = vmax.f32 %v789, -10.0
  %v1050 = vmax.f32 %v790, -10.0
  %v1051 = vmax.f32 %v791, -10.0
  %v1052 = vmax.f32 %v792, -10.0
  %v1053 = vmax.f32 %v793, -10.0
  %v1054 = vmax.f32 %v794, -10.0
  %v1055 = vmax.f32 %v795, -10.0
  %v1056 = vmax.f32 %v796, -10.0
  %v1057 = vmax.f32 %v797, -10.0
  %v1058 = vmax.f32 %v798, -10.0
  %v1059 = vmax.f32 %v799, -10.0
  %v1060 = vmax.f32 %v800, -10.0
  %v1061 = vmax.f32 %v801, -10.0
  %v1062 = vmax.f32 %v802, -10.0
  %v1063 = vmax.f32 %v803, -10.0
  %v1064 = vmax.f32 %v804, -10.0
  %v1065 = vmax.f32 %v805, -10.0
  %v1066 = vmax.f32 %v806, -10.0
  %v1067 = vmax.f32 %v807, -10.0
  %v1068 = vmax.f32 %v808, -10.0
  %v1069 = vmax.f32 %v809, -10.0
  %v1070 = vmax.f32 %v810, -10.0
  %v1071 = vmax.f32 %v811, -10.0
  %v1072 = vmax.f32 %v812, -10.0
  %v1073 = vmax.f32 %v813, -10.0
  %v1074 = vmax.f32 %v814, -10.0
  %v1075 = vmax.f32 %v815, -10.0
  %v1076 = vmax.f32 %v816, -10.0
  %v1077 = vmax.f32 %v817, -10.0
  %v1078 = vmin.f32 %v818, 10.0
  %v1079 = vmin.f32 %v819, 10.0
  %v1080 = vmin.f32 %v820, 10.0
  %v1081 = vmin.f32 %v821, 10.0
  %v1082 = vmin.f32 %v822, 10.0
  %v1083 = vmin.f32 %v823, 10.0
  %v1084 = vmin.f32 %v824, 10.0
  %v1085 = vmin.f32 %v825, 10.0
  %v1086 = vmin.f32 %v826, 10.0
  %v1087 = vmin.f32 %v827, 10.0
  %v1088 = vmin.f32 %v828, 10.0
  %v1089 = vmin.f32 %v829, 10.0
  %v1090 = vmin.f32 %v830, 10.0
  %v1091 = vmin.f32 %v831, 10.0
  %v1092 = vmin.f32 %v832, 10.0
  %v1093 = vmin.f32 %v833, 10.0
  %v1094 = vmin.f32 %v834, 10.0
  %v1095 = vmin.f32 %v835, 10.0
  %v1096 = vmin.f32 %v836, 10.0
  %v1097 = vmin.f32 %v837, 10.0
  %v1098 = vmin.f32 %v838, 10.0
  %v1099 = vmin.f32 %v839, 10.0
  %v1100 = vmin.f32 %v840, 10.0
  %v1101 = vmin.f32 %v841, 10.0
  %v1102 = vmin.f32 %v842, 10.0
  %v1103 = vmin.f32 %v843, 10.0
  %v1104 = vmin.f32 %v844, 10.0
  %v1105 = vmin.f32 %v845, 10.0
  %v1106 = vmin.f32 %v846, 10.0
  %v1107 = vmin.f32 %v847, 10.0
  %v1108 = vmin.f32 %v848, 10.0
  %v1109 = vmin.f32 %v849, 10.0
  %v1110 = vmin.f32 %v850, 10.0
  %v1111 = vmin.f32 %v851, 10.0
  %v1112 = vmin.f32 %v852, 10.0
  %v1113 = vmin.f32 %v853, 10.0
  %v1114 = vmin.f32 %v854, 10.0
  %v1115 = vmin.f32 %v855, 10.0
  %v1116 = vmin.f32 %v856, 10.0
  %v1117 = vmin.f32 %v857, 10.0
  %v1118 = vmin.f32 %v858, 10.0
  %v1119 = vmin.f32 %v859, 10.0
  %v1120 = vmin.f32 %v860, 10.0
  %v1121 = vmin.f32 %v861, 10.0
  %v1122 = vmin.f32 %v862, 10.0
  %v1123 = vmin.f32 %v863, 10.0
  %v1124 = vmin.f32 %v864, 10.0
  %v1125 = vmin.f32 %v865, 10.0
  %v1126 = vmin.f32 %v866, 10.0
  %v1127 = vmin.f32 %v867, 10.0
  %v1128 = vmin.f32 %v868, 10.0
  %v1129 = vmin.f32 %v869, 10.0
  %v1130 = vmin.f32 %v870, 10.0
  %v1131 = vmin.f32 %v871, 10.0
  %v1132 = vmin.f32 %v872, 10.0
  %v1133 = vmin.f32 %v873, 10.0
  %v1134 = vmin.f32 %v874, 10.0
  %v1135 = vmin.f32 %v875, 10.0
  %v1136 = vmin.f32 %v876, 10.0
  %v1137 = vmin.f32 %v877, 10.0
  %v1138 = vmin.f32 %v878, 10.0
  %v1139 = vmin.f32 %v879, 10.0
  %v1140 = vmin.f32 %v880, 10.0
  %v1141 = vmin.f32 %v881, 10.0
  %v1142 = vmin.f32 %v882, 10.0
  %v1143 = vmin.f32 %v883, 10.0
  %v1144 = vmin.f32 %v884, 10.0
  %v1145 = vmin.f32 %v885, 10.0
  %v1146 = vmin.f32 %v886, 10.0
  %v1147 = vmin.f32 %v887, 10.0
  %v1148 = vmin.f32 %v888, 10.0
  %v1149 = vmin.f32 %v889, 10.0
  %v1150 = vmin.f32 %v890, 10.0
  %v1151 = vmin.f32 %v891, 10.0
  %v1152 = vmin.f32 %v892, 10.0
  %v1153 = vmin.f32 %v893, 10.0
  %v1154 = vmin.f32 %v894, 10.0
  %v1155 = vmin.f32 %v895, 10.0
  %v1156 = vmin.f32 %v896, 10.0
  %v1157 = vmin.f32 %v897, 10.0
  %v1158 = vmin.f32 %v898, 10.0
  %v1159 = vmin.f32 %v899, 10.0
  %v1160 = vmin.f32 %v900, 10.0
  %v1161 = vmin.f32 %v901, 10.0
  %v1162 = vmin.f32 %v902, 10.0
  %v1163 = vmin.f32 %v903, 10.0
  %v1164 = vmin.f32 %v904, 10.0
  %v1165 = vmin.f32 %v905, 10.0
  %v1166 = vmin.f32 %v906, 10.0
  %v1167 = vmin.f32 %v907, 10.0
  %v1168 = vmin.f32 %v908, 10.0
  %v1169 = vmin.f32 %v909, 10.0
  %v1170 = vmin.f32 %v910, 10.0
  %v1171 = vmin.f32 %v911, 10.0
  %v1172 = vmin.f32 %v912, 10.0
  %v1173 = vmin.f32 %v913, 10.0
  %v1174 = vmin.f32 %v914, 10.0
  %v1175 = vmin.f32 %v915, 10.0
  %v1176 = vmin.f32 %v916, 10.0
  %v1177 = vmin.f32 %v917, 10.0
  %v1178 = vmin.f32 %v918, 10.0
  %v1179 = vmin.f32 %v919, 10.0
  %v1180 = vmin.f32 %v920, 10.0
  %v1181 = vmin.f32 %v921, 10.0
  %v1182 = vmin.f32 %v922, 10.0
  %v1183 = vmin.f32 %v923, 10.0
  %v1184 = vmin.f32 %v924, 10.0
  %v1185 = vmin.f32 %v925, 10.0
  %v1186 = vmin.f32 %v926, 10.0
  %v1187 = vmin.f32 %v927, 10.0
  %v1188 = vmin.f32 %v928, 10.0
  %v1189 = vmin.f32 %v929, 10.0
  %v1190 = vmin.f32 %v930, 10.0
  %v1191 = vmin.f32 %v931, 10.0
  %v1192 = vmin.f32 %v932, 10.0
  %v1193 = vmin.f32 %v933, 10.0
  %v1194 = vmin.f32 %v934, 10.0
  %v1195 = vmin.f32 %v935, 10.0
  %v1196 = vmin.f32 %v936, 10.0
  %v1197 = vmin.f32 %v937, 10.0
  %v1198 = vmin.f32 %v938, 10.0
  %v1199 = vmin.f32 %v939, 10.0
  %v1200 = vmin.f32 %v940, 10.0
  %v1201 = vmin.f32 %v941, 10.0
  %v1202 = vmin.f32 %v942, 10.0
  %v1203 = vmin.f32 %v943, 10.0
  %v1204 = vmin.f32 %v944, 10.0
  %v1205 = vmin.f32 %v945, 10.0
  %v1206 = vmin.f32 %v946, 10.0
  %v1207 = vmin.f32 %v947, 10.0
  %v1208 = vmin.f32 %v948, 10.0
  %v1209 = vmin.f32 %v949, 10.0
  %v1210 = vmin.f32 %v950, 10.0
  %v1211 = vmin.f32 %v951, 10.0
  %v1212 = vmin.f32 %v952, 10.0
  %v1213 = vmin.f32 %v953, 10.0
  %v1214 = vmin.f32 %v954, 10.0
  %v1215 = vmin.f32 %v955, 10.0
  %v1216 = vmin.f32 %v956, 10.0
  %v1217 = vmin.f32 %v957, 10.0
  %v1218 = vmin.f32 %v958, 10.0
  %v1219 = vmin.f32 %v959, 10.0
  %v1220 = vmin.f32 %v960, 10.0
  %v1221 = vmin.f32 %v961, 10.0
  %v1222 = vmin.f32 %v962, 10.0
  %v1223 = vmin.f32 %v963, 10.0
  %v1224 = vmin.f32 %v964, 10.0
  %v1225 = vmin.f32 %v965, 10.0
  %v1226 = vmin.f32 %v966, 10.0
  %v1227 = vmin.f32 %v967, 10.0
  %v1228 = vmin.f32 %v968, 10.0
  %v1229 = vmin.f32 %v969, 10.0
  %v1230 = vmin.f32 %v970, 10.0
  %v1231 = vmin.f32 %v971, 10.0
  %v1232 = vmin.f32 %v972, 10.0
  %v1233 = vmin.f32 %v973, 10.0
  %v1234 = vmin.f32 %v974, 10.0
  %v1235 = vmin.f32 %v975, 10.0
  %v1236 = vmin.f32 %v976, 10.0
  %v1237 = vmin.f32 %v977, 10.0
  %v1238 = vmin.f32 %v978, 10.0
  %v1239 = vmin.f32 %v979, 10.0
  %v1240 = vmin.f32 %v980, 10.0
  %v1241 = vmin.f32 %v981, 10.0
  %v1242 = vmin.f32 %v982, 10.0
  %v1243 = vmin.f32 %v983, 10.0
  %v1244 = vmin.f32 %v984, 10.0
  %v1245 = vmin.f32 %v985, 10.0
  %v1246 = vmin.f32 %v986, 10.0
  %v1247 = vmin.f32 %v987, 10.0
  %v1248 = vmin.f32 %v988, 10.0
  %v1249 = vmin.f32 %v989, 10.0
  %v1250 = vmin.f32 %v990, 10.0
  %v1251 = vmin.f32 %v991, 10.0
  %v1252 = vmin.f32 %v992, 10.0
  %v1253 = vmin.f32 %v993, 10.0
  %v1254 = vmin.f32 %v994, 10.0
  %v1255 = vmin.f32 %v995, 10.0
  %v1256 = vmin.f32 %v996, 10.0
  %v1257 = vmin.f32 %v997, 10.0
  %v1258 = vmin.f32 %v998, 10.0
  %v1259 = vmin.f32 %v999, 10.0
  %v1260 = vmin.f32 %v1000, 10.0
  %v1261 = vmin.f32 %v1001, 10.0
  %v1262 = vmin.f32 %v1002, 10.0
  %v1263 = vmin.f32 %v1003, 10.0
  %v1264 = vmin.f32 %v1004, 10.0
  %v1265 = vmin.f32 %v1005, 10.0
  %v1266 = vmin.f32 %v1006, 10.0
  %v1267 = vmin.f32 %v1007, 10.0
  %v1268 = vmin.f32 %v1008, 10.0
  %v1269 = vmin.f32 %v1009, 10.0
  %v1270 = vmin.f32 %v1010, 10.0
  %v1271 = vmin.f32 %v1011, 10.0
  %v1272 = vmin.f32 %v1012, 10.0
  %v1273 = vmin.f32 %v1013, 10.0
  %v1274 = vmin.f32 %v1014, 10.0
  %v1275 = vmin.f32 %v1015, 10.0
  %v1276 = vmin.f32 %v1016, 10.0
  %v1277 = vmin.f32 %v1017, 10.0
  %v1278 = vmin.f32 %v1018, 10.0
  %v1279 = vmin.f32 %v1019, 10.0
  %v1280 = vmin.f32 %v1020, 10.0
  %v1281 = vmin.f32 %v1021, 10.0
  %v1282 = vmin.f32 %v1022, 10.0
  %v1283 = vmin.f32 %v1023, 10.0
  %v1284 = vmin.f32 %v1024, 10.0
  %v1285 = vmin.f32 %v1025, 10.0
  %v1286 = vmin.f32 %v1026, 10.0
  %v1287 = vmin.f32 %v1027, 10.0
  %v1288 = vmin.f32 %v1028, 10.0
  %v1289 = vmin.f32 %v1029, 10.0
  %v1290 = vmin.f32 %v1030, 10.0
  %v1291 = vmin.f32 %v1031, 10.0
  %v1292 = vmin.f32 %v1032, 10.0
  %v1293 = vmin.f32 %v1033, 10.0
  %v1294 = vmin.f32 %v1034, 10.0
  %v1295 = vmin.f32 %v1035, 10.0
  %v1296 = vmin.f32 %v1036, 10.0
  %v1297 = vmin.f32 %v1037, 10.0
  %v1298 = vmin.f32 %v1038, 10.0
  %v1299 = vmin.f32 %v1039, 10.0
  %v1300 = vmin.f32 %v1040, 10.0
  %v1301 = vmin.f32 %v1041, 10.0
  %v1302 = vmin.f32 %v1042, 10.0
  %v1303 = vmin.f32 %v1043, 10.0
  %v1304 = vmin.f32 %v1044, 10.0
  %v1305 = vmin.f32 %v1045, 10.0
  %v1306 = vmin.f32 %v1046, 10.0
  %v1307 = vmin.f32 %v1047, 10.0
  %v1308 = vmin.f32 %v1048, 10.0
  %v1309 = vmin.f32 %v1049, 10.0
  %v1310 = vmin.f32 %v1050, 10.0
  %v1311 = vmin.f32 %v1051, 10.0
  %v1312 = vmin.f32 %v1052, 10.0
  %v1313 = vmin.f32 %v1053, 10.0
  %v1314 = vmin.f32 %v1054, 10.0
  %v1315 = vmin.f32 %v1055, 10.0
  %v1316 = vmin.f32 %v1056, 10.0
  %v1317 = vmin.f32 %v1057, 10.0
  %v1318 = vmin.f32 %v1058, 10.0
  %v1319 = vmin.f32 %v1059, 10.0
  %v1320 = vmin.f32 %v1060, 10.0
  %v1321 = vmin.f32 %v1061, 10.0
  %v1322 = vmin.f32 %v1062, 10.0
  %v1323 = vmin.f32 %v1063, 10.0
  %v1324 = vmin.f32 %v1064, 10.0
  %v1325 = vmin.f32 %v1065, 10.0
  %v1326 = vmin.f32 %v1066, 10.0
  %v1327 = vmin.f32 %v1067, 10.0
  %v1328 = vmin.f32 %v1068, 10.0
  %v1329 = vmin.f32 %v1069, 10.0
  %v1330 = vmin.f32 %v1070, 10.0
  %v1331 = vmin.f32 %v1071, 10.0
  %v1332 = vmin.f32 %v1072, 10.0
  %v1333 = vmin.f32 %v1073, 10.0
  %v1334 = vmin.f32 %v1074, 10.0
  %v1335 = vmin.f32 %v1075, 10.0
  %v1336 = vmin.f32 %v1076, 10.0
  %v1337 = vmin.f32 %v1077, 10.0
  %1338 = vst [vmem:[%s3] sm:$0xff] %v1078
  %vm1339 = vcmask 588800
  %1340 = vst.msk [vmem:[%s3 + $0x8] sm:$0xff] %vm1339, %v1079
  %1341 = vst [vmem:[%s3 + $0x10] sm:$0xff] %v1080
  %1342 = vst.msk [vmem:[%s3 + $0x18] sm:$0xff] %vm1339, %v1081
  %1343 = vst [vmem:[%s3 + $0x20] sm:$0xff] %v1082
  %1344 = vst.msk [vmem:[%s3 + $0x28] sm:$0xff] %vm1339, %v1083
  %1345 = vst [vmem:[%s3 + $0x30] sm:$0xff] %v1084
  %1346 = vst.msk [vmem:[%s3 + $0x38] sm:$0xff] %vm1339, %v1085
  %1347 = vst [vmem:[%s3 + $0x40] sm:$0xff] %v1086
  %1348 = vst.msk [vmem:[%s3 + $0x48] sm:$0xff] %vm1339, %v1087
  %1349 = vst [vmem:[%s3 + $0x50] sm:$0xff] %v1088
  %1350 = vst.msk [vmem:[%s3 + $0x58] sm:$0xff] %vm1339, %v1089
  %1351 = vst [vmem:[%s3 + $0x60] sm:$0xff] %v1090
  %1352 = vst.msk [vmem:[%s3 + $0x68] sm:$0xff] %vm1339, %v1091
  %1353 = vst [vmem:[%s3 + $0x70] sm:$0xff] %v1092
  %1354 = vst.msk [vmem:[%s3 + $0x78] sm:$0xff] %vm1339, %v1093
  %1355 = vst [vmem:[%s3 + $0x80] sm:$0xff] %v1094
  %1356 = vst.msk [vmem:[%s3 + $0x88] sm:$0xff] %vm1339, %v1095
  %1357 = vst [vmem:[%s3 + $0x90] sm:$0xff] %v1096
  %1358 = vst.msk [vmem:[%s3 + $0x98] sm:$0xff] %vm1339, %v1097
  %1359 = vst [vmem:[%s3 + $0xa0] sm:$0xff] %v1098
  %1360 = vst.msk [vmem:[%s3 + $0xa8] sm:$0xff] %vm1339, %v1099
  %1361 = vst [vmem:[%s3 + $0xb0] sm:$0xff] %v1100
  %1362 = vst.msk [vmem:[%s3 + $0xb8] sm:$0xff] %vm1339, %v1101
  %1363 = vst [vmem:[%s3 + $0xc0] sm:$0xff] %v1102
  %1364 = vst.msk [vmem:[%s3 + $0xc8] sm:$0xff] %vm1339, %v1103
  %1365 = vst [vmem:[%s3 + $0xd0] sm:$0xff] %v1104
  %1366 = vst.msk [vmem:[%s3 + $0xd8] sm:$0xff] %vm1339, %v1105
  %1367 = vst [vmem:[%s3 + $0xe0] sm:$0xff] %v1106
  %1368 = vst.msk [vmem:[%s3 + $0xe8] sm:$0xff] %vm1339, %v1107
  %1369 = vst [vmem:[%s3 + $0xf0] sm:$0xff] %v1108
  %1370 = vst.msk [vmem:[%s3 + $0xf8] sm:$0xff] %vm1339, %v1109
  %1371 = vst [vmem:[%s3 + $0x100] sm:$0xff] %v1110
  %1372 = vst.msk [vmem:[%s3 + $0x108] sm:$0xff] %vm1339, %v1111
  %1373 = vst [vmem:[%s3 + $0x110] sm:$0xff] %v1112
  %1374 = vst.msk [vmem:[%s3 + $0x118] sm:$0xff] %vm1339, %v1113
  %1375 = vst [vmem:[%s3 + $0x120] sm:$0xff] %v1114
  %1376 = vst.msk [vmem:[%s3 + $0x128] sm:$0xff] %vm1339, %v1115
  %1377 = vst [vmem:[%s3 + $0x130] sm:$0xff] %v1116
  %1378 = vst.msk [vmem:[%s3 + $0x138] sm:$0xff] %vm1339, %v1117
  %1379 = vst [vmem:[%s3 + $0x140] sm:$0xff] %v1118
  %1380 = vst.msk [vmem:[%s3 + $0x148] sm:$0xff] %vm1339, %v1119
  %1381 = vst [vmem:[%s3 + $0x150] sm:$0xff] %v1120
  %1382 = vst.msk [vmem:[%s3 + $0x158] sm:$0xff] %vm1339, %v1121
  %1383 = vst [vmem:[%s3 + $0x160] sm:$0xff] %v1122
  %1384 = vst.msk [vmem:[%s3 + $0x168] sm:$0xff] %vm1339, %v1123
  %1385 = vst [vmem:[%s3 + $0x170] sm:$0xff] %v1124
  %1386 = vst.msk [vmem:[%s3 + $0x178] sm:$0xff] %vm1339, %v1125
  %1387 = vst [vmem:[%s3 + $0x180] sm:$0xff] %v1126
  %1388 = vst.msk [vmem:[%s3 + $0x188] sm:$0xff] %vm1339, %v1127
  %1389 = vst [vmem:[%s3 + $0x190] sm:$0xff] %v1128
  %1390 = vst.msk [vmem:[%s3 + $0x198] sm:$0xff] %vm1339, %v1129
  %1391 = vst [vmem:[%s3 + $0x1a0] sm:$0xff] %v1130
  %1392 = vst.msk [vmem:[%s3 + $0x1a8] sm:$0xff] %vm1339, %v1131
  %1393 = vst [vmem:[%s3 + $0x1b0] sm:$0xff] %v1132
  %1394 = vst.msk [vmem:[%s3 + $0x1b8] sm:$0xff] %vm1339, %v1133
  %1395 = vst [vmem:[%s3 + $0x1c0] sm:$0xff] %v1134
  %1396 = vst.msk [vmem:[%s3 + $0x1c8] sm:$0xff] %vm1339, %v1135
  %1397 = vst [vmem:[%s3 + $0x1d0] sm:$0xff] %v1136
  %1398 = vst.msk [vmem:[%s3 + $0x1d8] sm:$0xff] %vm1339, %v1137
  %1399 = vst [vmem:[%s3 + $0x1e0] sm:$0xff] %v1138
  %1400 = vst.msk [vmem:[%s3 + $0x1e8] sm:$0xff] %vm1339, %v1139
  %1401 = vst [vmem:[%s3 + $0x1f0] sm:$0xff] %v1140
  %1402 = vst.msk [vmem:[%s3 + $0x1f8] sm:$0xff] %vm1339, %v1141
  %1403 = vst [vmem:[%s3 + $0x200] sm:$0xff] %v1142
  %1404 = vst.msk [vmem:[%s3 + $0x208] sm:$0xff] %vm1339, %v1143
  %1405 = vst [vmem:[%s3 + $0x210] sm:$0xff] %v1144
  %1406 = vst.msk [vmem:[%s3 + $0x218] sm:$0xff] %vm1339, %v1145
  %1407 = vst [vmem:[%s3 + $0x220] sm:$0xff] %v1146
  %1408 = vst.msk [vmem:[%s3 + $0x228] sm:$0xff] %vm1339, %v1147
  %1409 = vst [vmem:[%s3 + $0x230] sm:$0xff] %v1148
  %1410 = vst.msk [vmem:[%s3 + $0x238] sm:$0xff] %vm1339, %v1149
  %1411 = vst [vmem:[%s3 + $0x240] sm:$0xff] %v1150
  %1412 = vst.msk [vmem:[%s3 + $0x248] sm:$0xff] %vm1339, %v1151
  %1413 = vst [vmem:[%s3 + $0x250] sm:$0xff] %v1152
  %1414 = vst.msk [vmem:[%s3 + $0x258] sm:$0xff] %vm1339, %v1153
  %1415 = vst [vmem:[%s3 + $0x260] sm:$0xff] %v1154
  %1416 = vst.msk [vmem:[%s3 + $0x268] sm:$0xff] %vm1339, %v1155
  %1417 = vst [vmem:[%s3 + $0x270] sm:$0xff] %v1156
  %1418 = vst.msk [vmem:[%s3 + $0x278] sm:$0xff] %vm1339, %v1157
  %1419 = vst [vmem:[%s3 + $0x280] sm:$0xff] %v1158
  %1420 = vst.msk [vmem:[%s3 + $0x288] sm:$0xff] %vm1339, %v1159
  %1421 = vst [vmem:[%s3 + $0x290] sm:$0xff] %v1160
  %1422 = vst.msk [vmem:[%s3 + $0x298] sm:$0xff] %vm1339, %v1161
  %1423 = vst [vmem:[%s3 + $0x2a0] sm:$0xff] %v1162
  %1424 = vst.msk [vmem:[%s3 + $0x2a8] sm:$0xff] %vm1339, %v1163
  %1425 = vst [vmem:[%s3 + $0x2b0] sm:$0xff] %v1164
  %1426 = vst.msk [vmem:[%s3 + $0x2b8] sm:$0xff] %vm1339, %v1165
  %1427 = vst [vmem:[%s3 + $0x2c0] sm:$0xff] %v1166
  %1428 = vst.msk [vmem:[%s3 + $0x2c8] sm:$0xff] %vm1339, %v1167
  %1429 = vst [vmem:[%s3 + $0x2d0] sm:$0xff] %v1168
  %1430 = vst.msk [vmem:[%s3 + $0x2d8] sm:$0xff] %vm1339, %v1169
  %1431 = vst [vmem:[%s3 + $0x2e0] sm:$0xff] %v1170
  %1432 = vst.msk [vmem:[%s3 + $0x2e8] sm:$0xff] %vm1339, %v1171
  %1433 = vst [vmem:[%s3 + $0x2f0] sm:$0xff] %v1172
  %1434 = vst.msk [vmem:[%s3 + $0x2f8] sm:$0xff] %vm1339, %v1173
  %1435 = vst [vmem:[%s3 + $0x300] sm:$0xff] %v1174
  %1436 = vst.msk [vmem:[%s3 + $0x308] sm:$0xff] %vm1339, %v1175
  %1437 = vst [vmem:[%s3 + $0x310] sm:$0xff] %v1176
  %1438 = vst.msk [vmem:[%s3 + $0x318] sm:$0xff] %vm1339, %v1177
  %1439 = vst [vmem:[%s3 + $0x320] sm:$0xff] %v1178
  %1440 = vst.msk [vmem:[%s3 + $0x328] sm:$0xff] %vm1339, %v1179
  %1441 = vst [vmem:[%s3 + $0x330] sm:$0xff] %v1180
  %1442 = vst.msk [vmem:[%s3 + $0x338] sm:$0xff] %vm1339, %v1181
  %1443 = vst [vmem:[%s3 + $0x340] sm:$0xff] %v1182
  %1444 = vst.msk [vmem:[%s3 + $0x348] sm:$0xff] %vm1339, %v1183
  %1445 = vst [vmem:[%s3 + $0x350] sm:$0xff] %v1184
  %1446 = vst.msk [vmem:[%s3 + $0x358] sm:$0xff] %vm1339, %v1185
  %1447 = vst [vmem:[%s3 + $0x360] sm:$0xff] %v1186
  %1448 = vst.msk [vmem:[%s3 + $0x368] sm:$0xff] %vm1339, %v1187
  %1449 = vst [vmem:[%s3 + $0x370] sm:$0xff] %v1188
  %1450 = vst.msk [vmem:[%s3 + $0x378] sm:$0xff] %vm1339, %v1189
  %1451 = vst [vmem:[%s3 + $0x380] sm:$0xff] %v1190
  %1452 = vst.msk [vmem:[%s3 + $0x388] sm:$0xff] %vm1339, %v1191
  %1453 = vst [vmem:[%s3 + $0x390] sm:$0xff] %v1192
  %1454 = vst.msk [vmem:[%s3 + $0x398] sm:$0xff] %vm1339, %v1193
  %1455 = vst [vmem:[%s3 + $0x3a0] sm:$0xff] %v1194
  %1456 = vst.msk [vmem:[%s3 + $0x3a8] sm:$0xff] %vm1339, %v1195
  %1457 = vst [vmem:[%s3 + $0x3b0] sm:$0xff] %v1196
  %1458 = vst.msk [vmem:[%s3 + $0x3b8] sm:$0xff] %vm1339, %v1197
  %1459 = vst [vmem:[%s3 + $0x3c0] sm:$0xff] %v1198
  %1460 = vst.msk [vmem:[%s3 + $0x3c8] sm:$0xff] %vm1339, %v1199
  %1461 = vst [vmem:[%s3 + $0x3d0] sm:$0xff] %v1200
  %1462 = vst.msk [vmem:[%s3 + $0x3d8] sm:$0xff] %vm1339, %v1201
  %1463 = vst [vmem:[%s3 + $0x3e0] sm:$0xff] %v1202
  %1464 = vst.msk [vmem:[%s3 + $0x3e8] sm:$0xff] %vm1339, %v1203
  %1465 = vst [vmem:[%s3 + $0x3f0] sm:$0xff] %v1204
  %1466 = vst.msk [vmem:[%s3 + $0x3f8] sm:$0xff] %vm1339, %v1205
  %1467 = vst [vmem:[%s3 + $0x400] sm:$0xff] %v1206
  %1468 = vst.msk [vmem:[%s3 + $0x408] sm:$0xff] %vm1339, %v1207
  %1469 = vst [vmem:[%s3 + $0x410] sm:$0xff] %v1208
  %1470 = vst.msk [vmem:[%s3 + $0x418] sm:$0xff] %vm1339, %v1209
  %1471 = vst [vmem:[%s3 + $0x420] sm:$0xff] %v1210
  %1472 = vst.msk [vmem:[%s3 + $0x428] sm:$0xff] %vm1339, %v1211
  %1473 = vst [vmem:[%s3 + $0x430] sm:$0xff] %v1212
  %1474 = vst.msk [vmem:[%s3 + $0x438] sm:$0xff] %vm1339, %v1213
  %1475 = vst [vmem:[%s3 + $0x440] sm:$0xff] %v1214
  %1476 = vst.msk [vmem:[%s3 + $0x448] sm:$0xff] %vm1339, %v1215
  %1477 = vst [vmem:[%s3 + $0x450] sm:$0xff] %v1216
  %1478 = vst.msk [vmem:[%s3 + $0x458] sm:$0xff] %vm1339, %v1217
  %1479 = vst [vmem:[%s3 + $0x460] sm:$0xff] %v1218
  %1480 = vst.msk [vmem:[%s3 + $0x468] sm:$0xff] %vm1339, %v1219
  %1481 = vst [vmem:[%s3 + $0x470] sm:$0xff] %v1220
  %1482 = vst.msk [vmem:[%s3 + $0x478] sm:$0xff] %vm1339, %v1221
  %1483 = vst [vmem:[%s3 + $0x480] sm:$0xff] %v1222
  %1484 = vst.msk [vmem:[%s3 + $0x488] sm:$0xff] %vm1339, %v1223
  %1485 = vst [vmem:[%s3 + $0x490] sm:$0xff] %v1224
  %1486 = vst.msk [vmem:[%s3 + $0x498] sm:$0xff] %vm1339, %v1225
  %1487 = vst [vmem:[%s3 + $0x4a0] sm:$0xff] %v1226
  %1488 = vst.msk [vmem:[%s3 + $0x4a8] sm:$0xff] %vm1339, %v1227
  %1489 = vst [vmem:[%s3 + $0x4b0] sm:$0xff] %v1228
  %1490 = vst.msk [vmem:[%s3 + $0x4b8] sm:$0xff] %vm1339, %v1229
  %1491 = vst [vmem:[%s3 + $0x4c0] sm:$0xff] %v1230
  %1492 = vst.msk [vmem:[%s3 + $0x4c8] sm:$0xff] %vm1339, %v1231
  %1493 = vst [vmem:[%s3 + $0x4d0] sm:$0xff] %v1232
  %1494 = vst.msk [vmem:[%s3 + $0x4d8] sm:$0xff] %vm1339, %v1233
  %1495 = vst [vmem:[%s3 + $0x4e0] sm:$0xff] %v1234
  %1496 = vst.msk [vmem:[%s3 + $0x4e8] sm:$0xff] %vm1339, %v1235
  %1497 = vst [vmem:[%s3 + $0x4f0] sm:$0xff] %v1236
  %1498 = vst.msk [vmem:[%s3 + $0x4f8] sm:$0xff] %vm1339, %v1237
  %1499 = vst [vmem:[%s3 + $0x500] sm:$0xff] %v1238
  %1500 = vst.msk [vmem:[%s3 + $0x508] sm:$0xff] %vm1339, %v1239
  %1501 = vst [vmem:[%s3 + $0x510] sm:$0xff] %v1240
  %1502 = vst.msk [vmem:[%s3 + $0x518] sm:$0xff] %vm1339, %v1241
  %1503 = vst [vmem:[%s3 + $0x520] sm:$0xff] %v1242
  %1504 = vst.msk [vmem:[%s3 + $0x528] sm:$0xff] %vm1339, %v1243
  %1505 = vst [vmem:[%s3 + $0x530] sm:$0xff] %v1244
  %1506 = vst.msk [vmem:[%s3 + $0x538] sm:$0xff] %vm1339, %v1245
  %1507 = vst [vmem:[%s3 + $0x540] sm:$0xff] %v1246
  %1508 = vst.msk [vmem:[%s3 + $0x548] sm:$0xff] %vm1339, %v1247
  %1509 = vst [vmem:[%s3 + $0x550] sm:$0xff] %v1248
  %1510 = vst.msk [vmem:[%s3 + $0x558] sm:$0xff] %vm1339, %v1249
  %1511 = vst [vmem:[%s3 + $0x560] sm:$0xff] %v1250
  %1512 = vst.msk [vmem:[%s3 + $0x568] sm:$0xff] %vm1339, %v1251
  %1513 = vst [vmem:[%s3 + $0x570] sm:$0xff] %v1252
  %1514 = vst.msk [vmem:[%s3 + $0x578] sm:$0xff] %vm1339, %v1253
  %1515 = vst [vmem:[%s3 + $0x580] sm:$0xff] %v1254
  %1516 = vst.msk [vmem:[%s3 + $0x588] sm:$0xff] %vm1339, %v1255
  %1517 = vst [vmem:[%s3 + $0x590] sm:$0xff] %v1256
  %1518 = vst.msk [vmem:[%s3 + $0x598] sm:$0xff] %vm1339, %v1257
  %1519 = vst [vmem:[%s3 + $0x5a0] sm:$0xff] %v1258
  %1520 = vst.msk [vmem:[%s3 + $0x5a8] sm:$0xff] %vm1339, %v1259
  %1521 = vst [vmem:[%s3 + $0x5b0] sm:$0xff] %v1260
  %1522 = vst.msk [vmem:[%s3 + $0x5b8] sm:$0xff] %vm1339, %v1261
  %1523 = vst [vmem:[%s3 + $0x5c0] sm:$0xff] %v1262
  %1524 = vst.msk [vmem:[%s3 + $0x5c8] sm:$0xff] %vm1339, %v1263
  %1525 = vst [vmem:[%s3 + $0x5d0] sm:$0xff] %v1264
  %1526 = vst.msk [vmem:[%s3 + $0x5d8] sm:$0xff] %vm1339, %v1265
  %1527 = vst [vmem:[%s3 + $0x5e0] sm:$0xff] %v1266
  %1528 = vst.msk [vmem:[%s3 + $0x5e8] sm:$0xff] %vm1339, %v1267
  %1529 = vst [vmem:[%s3 + $0x5f0] sm:$0xff] %v1268
  %1530 = vst.msk [vmem:[%s3 + $0x5f8] sm:$0xff] %vm1339, %v1269
  %1531 = vst [vmem:[%s3 + $0x600] sm:$0xff] %v1270
  %1532 = vst.msk [vmem:[%s3 + $0x608] sm:$0xff] %vm1339, %v1271
  %1533 = vst [vmem:[%s3 + $0x610] sm:$0xff] %v1272
  %1534 = vst.msk [vmem:[%s3 + $0x618] sm:$0xff] %vm1339, %v1273
  %1535 = vst [vmem:[%s3 + $0x620] sm:$0xff] %v1274
  %1536 = vst.msk [vmem:[%s3 + $0x628] sm:$0xff] %vm1339, %v1275
  %1537 = vst [vmem:[%s3 + $0x630] sm:$0xff] %v1276
  %1538 = vst.msk [vmem:[%s3 + $0x638] sm:$0xff] %vm1339, %v1277
  %1539 = vst [vmem:[%s3 + $0x640] sm:$0xff] %v1278
  %1540 = vst.msk [vmem:[%s3 + $0x648] sm:$0xff] %vm1339, %v1279
  %1541 = vst [vmem:[%s3 + $0x650] sm:$0xff] %v1280
  %1542 = vst.msk [vmem:[%s3 + $0x658] sm:$0xff] %vm1339, %v1281
  %1543 = vst [vmem:[%s3 + $0x660] sm:$0xff] %v1282
  %1544 = vst.msk [vmem:[%s3 + $0x668] sm:$0xff] %vm1339, %v1283
  %1545 = vst [vmem:[%s3 + $0x670] sm:$0xff] %v1284
  %1546 = vst.msk [vmem:[%s3 + $0x678] sm:$0xff] %vm1339, %v1285
  %1547 = vst [vmem:[%s3 + $0x680] sm:$0xff] %v1286
  %1548 = vst.msk [vmem:[%s3 + $0x688] sm:$0xff] %vm1339, %v1287
  %1549 = vst [vmem:[%s3 + $0x690] sm:$0xff] %v1288
  %1550 = vst.msk [vmem:[%s3 + $0x698] sm:$0xff] %vm1339, %v1289
  %1551 = vst [vmem:[%s3 + $0x6a0] sm:$0xff] %v1290
  %1552 = vst.msk [vmem:[%s3 + $0x6a8] sm:$0xff] %vm1339, %v1291
  %1553 = vst [vmem:[%s3 + $0x6b0] sm:$0xff] %v1292
  %1554 = vst.msk [vmem:[%s3 + $0x6b8] sm:$0xff] %vm1339, %v1293
  %1555 = vst [vmem:[%s3 + $0x6c0] sm:$0xff] %v1294
  %1556 = vst.msk [vmem:[%s3 + $0x6c8] sm:$0xff] %vm1339, %v1295
  %1557 = vst [vmem:[%s3 + $0x6d0] sm:$0xff] %v1296
  %1558 = vst.msk [vmem:[%s3 + $0x6d8] sm:$0xff] %vm1339, %v1297
  %1559 = vst [vmem:[%s3 + $0x6e0] sm:$0xff] %v1298
  %1560 = vst.msk [vmem:[%s3 + $0x6e8] sm:$0xff] %vm1339, %v1299
  %1561 = vst [vmem:[%s3 + $0x6f0] sm:$0xff] %v1300
  %1562 = vst.msk [vmem:[%s3 + $0x6f8] sm:$0xff] %vm1339, %v1301
  %1563 = vst [vmem:[%s3 + $0x700] sm:$0xff] %v1302
  %1564 = vst.msk [vmem:[%s3 + $0x708] sm:$0xff] %vm1339, %v1303
  %1565 = vst [vmem:[%s3 + $0x710] sm:$0xff] %v1304
  %1566 = vst.msk [vmem:[%s3 + $0x718] sm:$0xff] %vm1339, %v1305
  %1567 = vst [vmem:[%s3 + $0x720] sm:$0xff] %v1306
  %1568 = vst.msk [vmem:[%s3 + $0x728] sm:$0xff] %vm1339, %v1307
  %1569 = vst [vmem:[%s3 + $0x730] sm:$0xff] %v1308
  %1570 = vst.msk [vmem:[%s3 + $0x738] sm:$0xff] %vm1339, %v1309
  %1571 = vst [vmem:[%s3 + $0x740] sm:$0xff] %v1310
  %1572 = vst.msk [vmem:[%s3 + $0x748] sm:$0xff] %vm1339, %v1311
  %1573 = vst [vmem:[%s3 + $0x750] sm:$0xff] %v1312
  %1574 = vst.msk [vmem:[%s3 + $0x758] sm:$0xff] %vm1339, %v1313
  %1575 = vst [vmem:[%s3 + $0x760] sm:$0xff] %v1314
  %1576 = vst.msk [vmem:[%s3 + $0x768] sm:$0xff] %vm1339, %v1315
  %1577 = vst [vmem:[%s3 + $0x770] sm:$0xff] %v1316
  %1578 = vst.msk [vmem:[%s3 + $0x778] sm:$0xff] %vm1339, %v1317
  %1579 = vst [vmem:[%s3 + $0x780] sm:$0xff] %v1318
  %1580 = vst.msk [vmem:[%s3 + $0x788] sm:$0xff] %vm1339, %v1319
  %1581 = vst [vmem:[%s3 + $0x790] sm:$0xff] %v1320
  %1582 = vst.msk [vmem:[%s3 + $0x798] sm:$0xff] %vm1339, %v1321
  %1583 = vst [vmem:[%s3 + $0x7a0] sm:$0xff] %v1322
  %1584 = vst.msk [vmem:[%s3 + $0x7a8] sm:$0xff] %vm1339, %v1323
  %1585 = vst [vmem:[%s3 + $0x7b0] sm:$0xff] %v1324
  %1586 = vst.msk [vmem:[%s3 + $0x7b8] sm:$0xff] %vm1339, %v1325
  %1587 = vst [vmem:[%s3 + $0x7c0] sm:$0xff] %v1326
  %1588 = vst.msk [vmem:[%s3 + $0x7c8] sm:$0xff] %vm1339, %v1327
  %1589 = vst [vmem:[%s3 + $0x7d0] sm:$0xff] %v1328
  %1590 = vst.msk [vmem:[%s3 + $0x7d8] sm:$0xff] %vm1339, %v1329
  %1591 = vst [vmem:[%s3 + $0x7e0] sm:$0xff] %v1330
  %1592 = vst.msk [vmem:[%s3 + $0x7e8] sm:$0xff] %vm1339, %v1331
  %1593 = vst [vmem:[%s3 + $0x7f0] sm:$0xff] %v1332
  %1594 = vst.msk [vmem:[%s3 + $0x7f8] sm:$0xff] %vm1339, %v1333
  %1595 = vst [vmem:[%s3 + $0x800] sm:$0xff] %v1334
  %1596 = vst.msk [vmem:[%s3 + $0x808] sm:$0xff] %vm1339, %v1335
  %1597 = vst [vmem:[%s3 + $0x810] sm:$0xff] %v1336
  %1598 = vst.msk [vmem:[%s3 + $0x818] sm:$0xff] %vm1339, %v1337
  // Predicated region
  $region14: #{tpu_custom_call.1} parent=0 // pred_check
    _
  $region15: #{tpu_custom_call.1} parent=0 // pred_check_branch
    %1600 = sbr.rel (0) target = $region17
  $region16: #{tpu_custom_call.1} parent=0 // pred_region
    _
  $region17: #{tpu_custom_call.1} parent=0 // pred_fallthru
    _
  // Predicated region
  $region18: #{tpu_custom_call.1} parent=0 // pred_check
    _
  $region19: #{tpu_custom_call.1} parent=0 // pred_check_branch
    %1602 = sbr.rel (0) target = $region21
  $region20: #{tpu_custom_call.1} parent=0 // pred_region
    _
  $region21: #{tpu_custom_call.1} parent=0 // pred_fallthru
    _

</llo_original>
